<compile_context>
chip_gen: v7x
topology: tpu7x:2x2x1
jax: 0.10.0
libtpu: 0.0.40
codegen_flags: <defaults>
</compile_context>

<pallas_src>
import math
import numpy as np
import jax
import jax.numpy as jnp
from jax import lax
from jax.experimental import pallas as pl
from jax.experimental.pallas import tpu as pltpu

# ---- model config (small, consistent with ModelArgs) ----
B, S, D = 2, 8, 64           # batch, seqlen, dim
H, KV = 4, 2                 # n_heads, n_kv_heads (exercises repeat_kv / GQA)
DH = D // H                  # head_dim = 16
DH2 = DH // 2                # 8
N_REP = H // KV              # 2
BS = B * S                   # 16 rows after folding batch into rows
QW = H * DH2                 # 32  (rotated-Q width)
ROT = QW + KV * DH2          # 48  (rotated Q|K width)
MULTIPLE_OF = 32
HID = int(2 * (4 * D) / 3)
HID = MULTIPLE_OF * ((HID + MULTIPLE_OF - 1) // MULTIPLE_OF)   # 192
EPS = 1e-5
SCALE = 1.0 / math.sqrt(DH)
NEG = -1e30


def _rmsnorm(v, w):
    ms = jnp.mean(v * v, axis=-1, keepdims=True)
    return v * lax.rsqrt(ms + EPS) * w


def block_kernel(cos_ref, sin_ref, mask_ref, x_ref,
                 wqkv_ref, wo_ref, w13_ref, w2_ref,
                 anw_ref, fnw_ref, out_ref):
    xf = x_ref[...]                                            # (BS, D)

    # ---------------- attention ----------------
    xn = _rmsnorm(xf, anw_ref[0])
    # fused Q|K|V projection: N = H*DH + 2*KV*DH = 128 lanes (lane-dense)
    qkv = jnp.dot(xn, wqkv_ref[...], preferred_element_type=jnp.float32)   # (BS, 128)

    # vectorized RoPE across all Q and K heads (half-split real|imag layout)
    cos = cos_ref[...]                                         # (BS, ROT)
    sin = sin_ref[...]
    rot_r = qkv[:, :ROT]
    rot_i = qkv[:, ROT:2 * ROT]
    v_all = qkv[:, 2 * ROT:]                                   # (BS, KV*DH)
    r2 = rot_r * cos - rot_i * sin
    i2 = rot_r * sin + rot_i * cos
    qr, kr = r2[:, :QW], r2[:, QW:]
    qi, ki = i2[:, :QW], i2[:, QW:]

    # stack heads along the sublane axis: rows ordered (head, batch, seq)
    Qr = jnp.concatenate([qr[:, h * DH2:(h + 1) * DH2] for h in range(H)], axis=0)
    Qi = jnp.concatenate([qi[:, h * DH2:(h + 1) * DH2] for h in range(H)], axis=0)
    Kr = jnp.concatenate([kr[:, (h // N_REP) * DH2:(h // N_REP + 1) * DH2]
                          for h in range(H)], axis=0)
    Ki = jnp.concatenate([ki[:, (h // N_REP) * DH2:(h // N_REP + 1) * DH2]
                          for h in range(H)], axis=0)
    Vb = jnp.concatenate([v_all[:, (h // N_REP) * DH:(h // N_REP + 1) * DH]
                          for h in range(H)], axis=0)          # (H*BS, DH)

    # one pair of score matmuls + ONE joint masked softmax for all heads/batches
    dn = (((1,), (1,)), ((), ()))                              # contract q.k on last dims
    scores = (lax.dot_general(Qr, Kr, dn, preferred_element_type=jnp.float32) +
              lax.dot_general(Qi, Ki, dn, preferred_element_type=jnp.float32)) * SCALE
    scores = scores + mask_ref[...]                            # causal + block-diag mask
    m = jnp.max(scores, axis=-1, keepdims=True)
    p = jnp.exp(scores - m)
    denom = jnp.sum(p, axis=-1, keepdims=True)
    p = p * pl.reciprocal(denom, approx=True)                  # EUP, off the VALU path
    o = jnp.dot(p, Vb, preferred_element_type=jnp.float32)     # (H*BS, DH)

    # output projection: each head's rows form a contiguous (BS, DH) slab
    parts = [jnp.dot(o[h * BS:(h + 1) * BS, :], wo_ref[h * DH:(h + 1) * DH, :],
                     preferred_element_type=jnp.float32) for h in range(H)]
    while len(parts) > 1:                                      # balanced add tree
        parts = [parts[i] + parts[i + 1] if i + 1 < len(parts) else parts[i]
                 for i in range(0, len(parts), 2)]
    hres = xf + parts[0]

    # ---------------- feed-forward (SwiGLU), fused w1|w3 ----------------
    hn = _rmsnorm(hres, fnw_ref[0])
    gu = jnp.dot(hn, w13_ref[...], preferred_element_type=jnp.float32)     # (BS, 2*HID)
    g, u = gu[:, :HID], gu[:, HID:]
    ff = jnp.dot(jax.nn.sigmoid(g) * g * u, w2_ref[...],
                 preferred_element_type=jnp.float32)                       # (BS, D)

    out_ref[...] = hres + ff


# ---------------- host-side one-time preprocessing ----------------
def _ri_split_idx(n_heads):
    """Interleaved (r,i,r,i,...) per head -> (all reals, all imags) column ids."""
    real = [h * DH + 2 * j for h in range(n_heads) for j in range(DH2)]
    imag = [h * DH + 2 * j + 1 for h in range(n_heads) for j in range(DH2)]
    return np.asarray(real), np.asarray(imag)


def prepare_inputs(params, freqs_cos, freqs_sin):
    """Fused/permuted weights, tiled RoPE tables and the additive attention
    mask.  Computed once and reused across calls (hoisted out of the kernel
    wrapper per the perf review)."""
    qr_idx, qi_idx = _ri_split_idx(H)
    kr_idx, ki_idx = _ri_split_idx(KV)
    wq_t = params["wq"].T                              # (D, H*DH)
    wk_t = params["wk"].T                              # (D, KV*DH)
    wv_t = params["wv"].T                              # (D, KV*DH)
    # fused QKV weight, columns: [Q_real(32) | K_real(16) | Q_imag(32) | K_imag(16) | V(32)]
    wqkv = jnp.concatenate([wq_t[:, qr_idx], wk_t[:, kr_idx],
                            wq_t[:, qi_idx], wk_t[:, ki_idx], wv_t], axis=1)   # (D, 128)
    wo_t = params["wo"].T                              # (H*DH, D)
    w13 = jnp.concatenate([params["w1"].T, params["w3"].T], axis=1)            # (D, 2*HID)
    w2_t = params["w2"].T                              # (HID, D)
    anw = params["anw"].reshape(1, D)
    fnw = params["fnw"].reshape(1, D)

    # RoPE tables tiled over (q-heads | k-heads) columns and over batch rows.
    cos_rot = jnp.concatenate([jnp.tile(freqs_cos, (1, H)),
                               jnp.tile(freqs_cos, (1, KV))], axis=1)          # (S, ROT)
    sin_rot = jnp.concatenate([jnp.tile(freqs_sin, (1, H)),
                               jnp.tile(freqs_sin, (1, KV))], axis=1)
    cos_all = jnp.tile(cos_rot, (B, 1))                # (BS, ROT)
    sin_all = jnp.tile(sin_rot, (B, 1))

    # additive mask over the stacked (head, batch, seq) row/col layout:
    # keep entries only inside the same (head,batch) block AND causal.
    r = np.arange(H * BS)
    blk, pos = r // S, r % S
    mask = np.where((blk[:, None] == blk[None, :]) & (pos[None, :] <= pos[:, None]),
                    0.0, NEG).astype(np.float32)       # (H*BS, H*BS) = (64, 64)

    return dict(cos=cos_all, sin=sin_all, mask=jnp.asarray(mask),
                wqkv=wqkv, wo=wo_t, w13=w13, w2=w2_t, anw=anw, fnw=fnw)


def _full(a):
    nd = a.ndim
    return pl.BlockSpec(a.shape, lambda i, nd=nd: (0,) * nd)


@jax.jit
def transformer_block(x, prep):
    x2d = x.reshape(BS, D)                             # fold batch into rows (free)
    ins = (prep["cos"], prep["sin"], prep["mask"], x2d,
           prep["wqkv"], prep["wo"], prep["w13"], prep["w2"],
           prep["anw"], prep["fnw"])
    out2d = pl.pallas_call(
        block_kernel,
        out_shape=jax.ShapeDtypeStruct((BS, D), jnp.float32),
        grid_spec=pltpu.PrefetchScalarGridSpec(
            num_scalar_prefetch=0,
            grid=(1,),                                 # single fused step (tiny problem)
            in_specs=[_full(a) for a in ins],
            out_specs=pl.BlockSpec((BS, D), lambda i: (0, 0)),
        ),
        compiler_params=pltpu.CompilerParams(
            dimension_semantics=("arbitrary",)),
    )(*ins)
    return out2d.reshape(B, S, D)


# ---------------- pure-JAX reference (mirrors the PyTorch module) ----------------
def ref_forward(x, cos, sin, p):
    def rms(v, w):
        return v * lax.rsqrt(jnp.mean(v * v, -1, keepdims=True) + EPS) * w

    xn = rms(x, p["anw"])
    q = (xn @ p["wq"].T).reshape(B, S, H, DH)
    k = (xn @ p["wk"].T).reshape(B, S, KV, DH)
    v = (xn @ p["wv"].T).reshape(B, S, KV, DH)

    def rope(t):
        tr, ti = t[..., 0::2], t[..., 1::2]
        c = cos[None, :, None, :]
        s = sin[None, :, None, :]
        o_r = tr * c - ti * s
        o_i = tr * s + ti * c
        return jnp.stack([o_r, o_i], axis=-1).reshape(t.shape)

    q, k = rope(q), rope(k)
    k = jnp.repeat(k, N_REP, axis=2)
    v = jnp.repeat(v, N_REP, axis=2)
    q, k, v = (t.transpose(0, 2, 1, 3) for t in (q, k, v))
    scores = jnp.einsum("bhqd,bhkd->bhqk", q, k) * SCALE
    mask = jnp.tril(jnp.ones((S, S), bool))
    scores = jnp.where(mask, scores, -jnp.inf)
    a = jax.nn.softmax(scores, axis=-1)
    o = jnp.einsum("bhqk,bhkd->bhqd", a, v).transpose(0, 2, 1, 3).reshape(B, S, H * DH)
    h = x + o @ p["wo"].T
    hn = rms(h, p["fnw"])
    ff = (jax.nn.silu(hn @ p["w1"].T) * (hn @ p["w3"].T)) @ p["w2"].T
    return h + ff


def init_params(key):
    ks = jax.random.split(key, 7)

    def lin(k, fan_in, fan_out):
        return jax.random.normal(k, (fan_out, fan_in), jnp.float32) * 0.05

    return {
        "wq": lin(ks[0], D, H * DH),
        "wk": lin(ks[1], D, KV * DH),
        "wv": lin(ks[2], D, KV * DH),
        "wo": lin(ks[3], H * DH, D),
        "w1": lin(ks[4], D, HID),
        "w2": lin(ks[5], HID, D),
        "w3": lin(ks[6], D, HID),
        "anw": jnp.ones((D,), jnp.float32),   # RMSNorm weights init to ones
        "fnw": jnp.ones((D,), jnp.float32),
    }


if __name__ == "__main__":
    key = jax.random.PRNGKey(0)
    kx, kp = jax.random.split(key)
    x = jax.random.normal(kx, (B, S, D), jnp.float32)
    params = init_params(kp)

    # rotary frequency tables (seqlen, head_dim // 2)
    t = jnp.arange(S, dtype=jnp.float32)
    freqs = 1.0 / (10000.0 ** (jnp.arange(0, DH, 2, dtype=jnp.float32) / DH))
    angles = jnp.outer(t, freqs)
    freqs_cos = jnp.cos(angles)
    freqs_sin = jnp.sin(angles)

    prep = prepare_inputs(params, freqs_cos, freqs_sin)   # one-time preprocessing
    out = transformer_block(x, prep)
    jax.block_until_ready(out)

    ref = ref_forward(x, freqs_cos, freqs_sin, params)
    max_err = float(jnp.max(jnp.abs(out - ref)))
    # tolerance slightly relaxed vs f32 exact because of pl.reciprocal(approx=True)
    assert jnp.allclose(out, ref, atol=2e-3, rtol=2e-3), f"max_err={max_err}"
    print("KERNEL_OK")
</pallas_src>

<mosaic_0001>
module attributes {stable_mosaic.version = 11 : i64} {
  func.func @block_kernel(%arg0: i32, %arg1: memref<16x48xf32, #tpu.memory_space<vmem>>, %arg2: memref<16x48xf32, #tpu.memory_space<vmem>>, %arg3: memref<64x64xf32, #tpu.memory_space<vmem>>, %arg4: memref<16x64xf32, #tpu.memory_space<vmem>>, %arg5: memref<64x128xf32, #tpu.memory_space<vmem>>, %arg6: memref<64x64xf32, #tpu.memory_space<vmem>>, %arg7: memref<64x384xf32, #tpu.memory_space<vmem>>, %arg8: memref<192x64xf32, #tpu.memory_space<vmem>>, %arg9: memref<1x64xf32, #tpu.memory_space<vmem>>, %arg10: memref<1x64xf32, #tpu.memory_space<vmem>>, %arg11: memref<16x64xf32, #tpu.memory_space<vmem>>) attributes {dimension_semantics = [#tpu.dimension_semantics<arbitrary>], iteration_bounds = array<i64: 1>, scalar_prefetch = 0 : i64, scratch_operands = 0 : i64, tpu.core_type = #tpu.core_type<tc>, window_params = [{pipeline_mode = #tpu.pipeline_mode<synchronous>, transform_indices = @transform_0, window_bounds = array<i64: 16, 48>}, {pipeline_mode = #tpu.pipeline_mode<synchronous>, transform_indices = @transform_1, window_bounds = array<i64: 16, 48>}, {pipeline_mode = #tpu.pipeline_mode<synchronous>, transform_indices = @transform_2, window_bounds = array<i64: 64, 64>}, {pipeline_mode = #tpu.pipeline_mode<synchronous>, transform_indices = @transform_3, window_bounds = array<i64: 16, 64>}, {pipeline_mode = #tpu.pipeline_mode<synchronous>, transform_indices = @transform_4, window_bounds = array<i64: 64, 128>}, {pipeline_mode = #tpu.pipeline_mode<synchronous>, transform_indices = @transform_5, window_bounds = array<i64: 64, 64>}, {pipeline_mode = #tpu.pipeline_mode<synchronous>, transform_indices = @transform_6, window_bounds = array<i64: 64, 384>}, {pipeline_mode = #tpu.pipeline_mode<synchronous>, transform_indices = @transform_7, window_bounds = array<i64: 192, 64>}, {pipeline_mode = #tpu.pipeline_mode<synchronous>, transform_indices = @transform_8, window_bounds = array<i64: 1, 64>}, {pipeline_mode = #tpu.pipeline_mode<synchronous>, transform_indices = @transform_9, window_bounds = array<i64: 1, 64>}, {pipeline_mode = #tpu.pipeline_mode<synchronous>, transform_indices = @transform_10, window_bounds = array<i64: 16, 64>}]} {
    %c0 = arith.constant 0 : index
    %c0_0 = arith.constant 0 : index
    %0 = vector.load %arg4[%c0, %c0_0] : memref<16x64xf32, #tpu.memory_space<vmem>>, vector<16x64xf32>
    %c0_1 = arith.constant 0 : index
    %c0_2 = arith.constant 0 : index
    %1 = vector.load %arg9[%c0_1, %c0_2] : memref<1x64xf32, #tpu.memory_space<vmem>>, vector<1x64xf32>
    %2 = vector.shape_cast %1 : vector<1x64xf32> to vector<64xf32>
    %3 = arith.mulf %0, %0 : vector<16x64xf32>
    %cst = arith.constant dense<0.000000e+00> : vector<16xf32>
    %4 = vector.multi_reduction <add>, %3, %cst [1] : vector<16x64xf32> to vector<16xf32>
    %5 = vector.shape_cast %4 : vector<16xf32> to vector<16x1xf32>
    %cst_3 = arith.constant 6.400000e+01 : f32
    %6 = vector.broadcast %cst_3 : f32 to vector<16x1xf32>
    %7 = arith.divf %5, %6 : vector<16x1xf32>
    %cst_4 = arith.constant 9.99999974E-6 : f32
    %8 = vector.broadcast %cst_4 : f32 to vector<16x1xf32>
    %9 = arith.addf %7, %8 : vector<16x1xf32>
    %10 = math.rsqrt %9 : vector<16x1xf32>
    %11 = vector.broadcast %10 : vector<16x1xf32> to vector<16x64xf32>
    %12 = arith.mulf %0, %11 : vector<16x64xf32>
    %13 = vector.shape_cast %2 : vector<64xf32> to vector<1x64xf32>
    %14 = vector.broadcast %13 : vector<1x64xf32> to vector<16x64xf32>
    %15 = arith.mulf %12, %14 : vector<16x64xf32>
    %c0_5 = arith.constant 0 : index
    %c0_6 = arith.constant 0 : index
    %16 = vector.load %arg5[%c0_5, %c0_6] : memref<64x128xf32, #tpu.memory_space<vmem>>, vector<64x128xf32>
    %cst_7 = arith.constant dense<0.000000e+00> : vector<16x128xf32>
    %17 = tpu.matmul %15, %16, %cst_7 {dimension_numbers = #tpu.dot_dimension_numbers<[1], [0], [0], [1], [0, 0, 1, 1], [], []>} : vector<16x64xf32>, vector<64x128xf32>, vector<16x128xf32> -> vector<16x128xf32>
    %c0_8 = arith.constant 0 : index
    %c0_9 = arith.constant 0 : index
    %18 = vector.load %arg1[%c0_8, %c0_9] : memref<16x48xf32, #tpu.memory_space<vmem>>, vector<16x48xf32>
    %c0_10 = arith.constant 0 : index
    %c0_11 = arith.constant 0 : index
    %19 = vector.load %arg2[%c0_10, %c0_11] : memref<16x48xf32, #tpu.memory_space<vmem>>, vector<16x48xf32>
    %20 = vector.extract_strided_slice %17 {offsets = [0, 0], sizes = [16, 48], strides = [1, 1]} : vector<16x128xf32> to vector<16x48xf32>
    %21 = vector.extract_strided_slice %17 {offsets = [0, 48], sizes = [16, 48], strides = [1, 1]} : vector<16x128xf32> to vector<16x48xf32>
    %22 = vector.extract_strided_slice %17 {offsets = [0, 96], sizes = [16, 32], strides = [1, 1]} : vector<16x128xf32> to vector<16x32xf32>
    %23 = arith.mulf %20, %18 : vector<16x48xf32>
    %24 = arith.mulf %21, %19 : vector<16x48xf32>
    %25 = arith.subf %23, %24 : vector<16x48xf32>
    %26 = arith.mulf %20, %19 : vector<16x48xf32>
    %27 = arith.mulf %21, %18 : vector<16x48xf32>
    %28 = arith.addf %26, %27 : vector<16x48xf32>
    %29 = vector.extract_strided_slice %25 {offsets = [0, 0], sizes = [16, 32], strides = [1, 1]} : vector<16x48xf32> to vector<16x32xf32>
    %30 = vector.extract_strided_slice %25 {offsets = [0, 32], sizes = [16, 16], strides = [1, 1]} : vector<16x48xf32> to vector<16x16xf32>
    %31 = vector.extract_strided_slice %28 {offsets = [0, 0], sizes = [16, 32], strides = [1, 1]} : vector<16x48xf32> to vector<16x32xf32>
    %32 = vector.extract_strided_slice %28 {offsets = [0, 32], sizes = [16, 16], strides = [1, 1]} : vector<16x48xf32> to vector<16x16xf32>
    %33 = vector.extract_strided_slice %29 {offsets = [0, 0], sizes = [16, 8], strides = [1, 1]} : vector<16x32xf32> to vector<16x8xf32>
    %34 = vector.extract_strided_slice %29 {offsets = [0, 8], sizes = [16, 8], strides = [1, 1]} : vector<16x32xf32> to vector<16x8xf32>
    %35 = vector.extract_strided_slice %29 {offsets = [0, 16], sizes = [16, 8], strides = [1, 1]} : vector<16x32xf32> to vector<16x8xf32>
    %36 = vector.extract_strided_slice %29 {offsets = [0, 24], sizes = [16, 8], strides = [1, 1]} : vector<16x32xf32> to vector<16x8xf32>
    %37 = tpu.concatenate %33, %34, %35, %36 in 0 : vector<16x8xf32>, vector<16x8xf32>, vector<16x8xf32>, vector<16x8xf32> -> vector<64x8xf32>
    %38 = vector.extract_strided_slice %31 {offsets = [0, 0], sizes = [16, 8], strides = [1, 1]} : vector<16x32xf32> to vector<16x8xf32>
    %39 = vector.extract_strided_slice %31 {offsets = [0, 8], sizes = [16, 8], strides = [1, 1]} : vector<16x32xf32> to vector<16x8xf32>
    %40 = vector.extract_strided_slice %31 {offsets = [0, 16], sizes = [16, 8], strides = [1, 1]} : vector<16x32xf32> to vector<16x8xf32>
    %41 = vector.extract_strided_slice %31 {offsets = [0, 24], sizes = [16, 8], strides = [1, 1]} : vector<16x32xf32> to vector<16x8xf32>
    %42 = tpu.concatenate %38, %39, %40, %41 in 0 : vector<16x8xf32>, vector<16x8xf32>, vector<16x8xf32>, vector<16x8xf32> -> vector<64x8xf32>
    %43 = vector.extract_strided_slice %30 {offsets = [0, 0], sizes = [16, 8], strides = [1, 1]} : vector<16x16xf32> to vector<16x8xf32>
    %44 = vector.extract_strided_slice %30 {offsets = [0, 0], sizes = [16, 8], strides = [1, 1]} : vector<16x16xf32> to vector<16x8xf32>
    %45 = vector.extract_strided_slice %30 {offsets = [0, 8], sizes = [16, 8], strides = [1, 1]} : vector<16x16xf32> to vector<16x8xf32>
    %46 = vector.extract_strided_slice %30 {offsets = [0, 8], sizes = [16, 8], strides = [1, 1]} : vector<16x16xf32> to vector<16x8xf32>
    %47 = tpu.concatenate %43, %44, %45, %46 in 0 : vector<16x8xf32>, vector<16x8xf32>, vector<16x8xf32>, vector<16x8xf32> -> vector<64x8xf32>
    %48 = vector.extract_strided_slice %32 {offsets = [0, 0], sizes = [16, 8], strides = [1, 1]} : vector<16x16xf32> to vector<16x8xf32>
    %49 = vector.extract_strided_slice %32 {offsets = [0, 0], sizes = [16, 8], strides = [1, 1]} : vector<16x16xf32> to vector<16x8xf32>
    %50 = vector.extract_strided_slice %32 {offsets = [0, 8], sizes = [16, 8], strides = [1, 1]} : vector<16x16xf32> to vector<16x8xf32>
    %51 = vector.extract_strided_slice %32 {offsets = [0, 8], sizes = [16, 8], strides = [1, 1]} : vector<16x16xf32> to vector<16x8xf32>
    %52 = tpu.concatenate %48, %49, %50, %51 in 0 : vector<16x8xf32>, vector<16x8xf32>, vector<16x8xf32>, vector<16x8xf32> -> vector<64x8xf32>
    %53 = vector.extract_strided_slice %22 {offsets = [0, 0], sizes = [16, 16], strides = [1, 1]} : vector<16x32xf32> to vector<16x16xf32>
    %54 = vector.extract_strided_slice %22 {offsets = [0, 0], sizes = [16, 16], strides = [1, 1]} : vector<16x32xf32> to vector<16x16xf32>
    %55 = vector.extract_strided_slice %22 {offsets = [0, 16], sizes = [16, 16], strides = [1, 1]} : vector<16x32xf32> to vector<16x16xf32>
    %56 = vector.extract_strided_slice %22 {offsets = [0, 16], sizes = [16, 16], strides = [1, 1]} : vector<16x32xf32> to vector<16x16xf32>
    %57 = tpu.concatenate %53, %54, %55, %56 in 0 : vector<16x16xf32>, vector<16x16xf32>, vector<16x16xf32>, vector<16x16xf32> -> vector<64x16xf32>
    %cst_12 = arith.constant dense<0.000000e+00> : vector<64x64xf32>
    %58 = tpu.matmul %37, %47, %cst_12 {dimension_numbers = #tpu.dot_dimension_numbers<[1], [1], [0], [0], [0, 0, 1, 0], [], []>} : vector<64x8xf32>, vector<64x8xf32>, vector<64x64xf32> -> vector<64x64xf32>
    %cst_13 = arith.constant dense<0.000000e+00> : vector<64x64xf32>
    %59 = tpu.matmul %42, %52, %cst_13 {dimension_numbers = #tpu.dot_dimension_numbers<[1], [1], [0], [0], [0, 0, 1, 0], [], []>} : vector<64x8xf32>, vector<64x8xf32>, vector<64x64xf32> -> vector<64x64xf32>
    %60 = arith.addf %58, %59 : vector<64x64xf32>
    %cst_14 = arith.constant 2.500000e-01 : f32
    %61 = vector.broadcast %cst_14 : f32 to vector<64x64xf32>
    %62 = arith.mulf %60, %61 : vector<64x64xf32>
    %c0_15 = arith.constant 0 : index
    %c0_16 = arith.constant 0 : index
    %63 = vector.load %arg3[%c0_15, %c0_16] : memref<64x64xf32, #tpu.memory_space<vmem>>, vector<64x64xf32>
    %64 = arith.addf %62, %63 : vector<64x64xf32>
    %cst_17 = arith.constant dense<0xFF800000> : vector<64xf32>
    %65 = vector.multi_reduction <maximumf>, %64, %cst_17 [1] : vector<64x64xf32> to vector<64xf32>
    %66 = vector.shape_cast %65 : vector<64xf32> to vector<64x1xf32>
    %67 = vector.broadcast %66 : vector<64x1xf32> to vector<64x64xf32>
    %68 = arith.subf %64, %67 : vector<64x64xf32>
    %69 = math.exp %68 : vector<64x64xf32>
    %cst_18 = arith.constant dense<0.000000e+00> : vector<64xf32>
    %70 = vector.multi_reduction <add>, %69, %cst_18 [1] : vector<64x64xf32> to vector<64xf32>
    %71 = vector.shape_cast %70 : vector<64xf32> to vector<64x1xf32>
    %72 = tpu.reciprocal %71 {approx = true} : vector<64x1xf32> -> vector<64x1xf32>
    %73 = vector.broadcast %72 : vector<64x1xf32> to vector<64x64xf32>
    %74 = arith.mulf %69, %73 : vector<64x64xf32>
    %cst_19 = arith.constant dense<0.000000e+00> : vector<64x16xf32>
    %75 = tpu.matmul %74, %57, %cst_19 {dimension_numbers = #tpu.dot_dimension_numbers<[1], [0], [0], [1], [0, 0, 1, 1], [], []>} : vector<64x64xf32>, vector<64x16xf32>, vector<64x16xf32> -> vector<64x16xf32>
    %76 = vector.extract_strided_slice %75 {offsets = [0, 0], sizes = [16, 16], strides = [1, 1]} : vector<64x16xf32> to vector<16x16xf32>
    %c0_20 = arith.constant 0 : index
    %c0_21 = arith.constant 0 : index
    %77 = vector.load %arg6[%c0_20, %c0_21] : memref<64x64xf32, #tpu.memory_space<vmem>>, vector<16x64xf32>
    %cst_22 = arith.constant dense<0.000000e+00> : vector<16x64xf32>
    %78 = tpu.matmul %76, %77, %cst_22 {dimension_numbers = #tpu.dot_dimension_numbers<[1], [0], [0], [1], [0, 0, 1, 1], [], []>} : vector<16x16xf32>, vector<16x64xf32>, vector<16x64xf32> -> vector<16x64xf32>
    %79 = vector.extract_strided_slice %75 {offsets = [16, 0], sizes = [16, 16], strides = [1, 1]} : vector<64x16xf32> to vector<16x16xf32>
    %c16 = arith.constant 16 : index
    %c0_23 = arith.constant 0 : index
    %80 = vector.load %arg6[%c16, %c0_23] : memref<64x64xf32, #tpu.memory_space<vmem>>, vector<16x64xf32>
    %cst_24 = arith.constant dense<0.000000e+00> : vector<16x64xf32>
    %81 = tpu.matmul %79, %80, %cst_24 {dimension_numbers = #tpu.dot_dimension_numbers<[1], [0], [0], [1], [0, 0, 1, 1], [], []>} : vector<16x16xf32>, vector<16x64xf32>, vector<16x64xf32> -> vector<16x64xf32>
    %82 = vector.extract_strided_slice %75 {offsets = [32, 0], sizes = [16, 16], strides = [1, 1]} : vector<64x16xf32> to vector<16x16xf32>
    %c32 = arith.constant 32 : index
    %c0_25 = arith.constant 0 : index
    %83 = vector.load %arg6[%c32, %c0_25] : memref<64x64xf32, #tpu.memory_space<vmem>>, vector<16x64xf32>
    %cst_26 = arith.constant dense<0.000000e+00> : vector<16x64xf32>
    %84 = tpu.matmul %82, %83, %cst_26 {dimension_numbers = #tpu.dot_dimension_numbers<[1], [0], [0], [1], [0, 0, 1, 1], [], []>} : vector<16x16xf32>, vector<16x64xf32>, vector<16x64xf32> -> vector<16x64xf32>
    %85 = vector.extract_strided_slice %75 {offsets = [48, 0], sizes = [16, 16], strides = [1, 1]} : vector<64x16xf32> to vector<16x16xf32>
    %c48 = arith.constant 48 : index
    %c0_27 = arith.constant 0 : index
    %86 = vector.load %arg6[%c48, %c0_27] : memref<64x64xf32, #tpu.memory_space<vmem>>, vector<16x64xf32>
    %cst_28 = arith.constant dense<0.000000e+00> : vector<16x64xf32>
    %87 = tpu.matmul %85, %86, %cst_28 {dimension_numbers = #tpu.dot_dimension_numbers<[1], [0], [0], [1], [0, 0, 1, 1], [], []>} : vector<16x16xf32>, vector<16x64xf32>, vector<16x64xf32> -> vector<16x64xf32>
    %88 = arith.addf %78, %81 : vector<16x64xf32>
    %89 = arith.addf %84, %87 : vector<16x64xf32>
    %90 = arith.addf %88, %89 : vector<16x64xf32>
    %91 = arith.addf %0, %90 : vector<16x64xf32>
    %c0_29 = arith.constant 0 : index
    %c0_30 = arith.constant 0 : index
    %92 = vector.load %arg10[%c0_29, %c0_30] : memref<1x64xf32, #tpu.memory_space<vmem>>, vector<1x64xf32>
    %93 = vector.shape_cast %92 : vector<1x64xf32> to vector<64xf32>
    %94 = arith.mulf %91, %91 : vector<16x64xf32>
    %cst_31 = arith.constant dense<0.000000e+00> : vector<16xf32>
    %95 = vector.multi_reduction <add>, %94, %cst_31 [1] : vector<16x64xf32> to vector<16xf32>
    %96 = vector.shape_cast %95 : vector<16xf32> to vector<16x1xf32>
    %cst_32 = arith.constant 6.400000e+01 : f32
    %97 = vector.broadcast %cst_32 : f32 to vector<16x1xf32>
    %98 = arith.divf %96, %97 : vector<16x1xf32>
    %cst_33 = arith.constant 9.99999974E-6 : f32
    %99 = vector.broadcast %cst_33 : f32 to vector<16x1xf32>
    %100 = arith.addf %98, %99 : vector<16x1xf32>
    %101 = math.rsqrt %100 : vector<16x1xf32>
    %102 = vector.broadcast %101 : vector<16x1xf32> to vector<16x64xf32>
    %103 = arith.mulf %91, %102 : vector<16x64xf32>
    %104 = vector.shape_cast %93 : vector<64xf32> to vector<1x64xf32>
    %105 = vector.broadcast %104 : vector<1x64xf32> to vector<16x64xf32>
    %106 = arith.mulf %103, %105 : vector<16x64xf32>
    %c0_34 = arith.constant 0 : index
    %c0_35 = arith.constant 0 : index
    %107 = vector.load %arg7[%c0_34, %c0_35] : memref<64x384xf32, #tpu.memory_space<vmem>>, vector<64x384xf32>
    %cst_36 = arith.constant dense<0.000000e+00> : vector<16x384xf32>
    %108 = tpu.matmul %106, %107, %cst_36 {dimension_numbers = #tpu.dot_dimension_numbers<[1], [0], [0], [1], [0, 0, 1, 1], [], []>} : vector<16x64xf32>, vector<64x384xf32>, vector<16x384xf32> -> vector<16x384xf32>
    %109 = vector.extract_strided_slice %108 {offsets = [0, 0], sizes = [16, 192], strides = [1, 1]} : vector<16x384xf32> to vector<16x192xf32>
    %110 = vector.extract_strided_slice %108 {offsets = [0, 192], sizes = [16, 192], strides = [1, 1]} : vector<16x384xf32> to vector<16x192xf32>
    %111 = arith.negf %109 : vector<16x192xf32>
    %112 = math.exp %111 : vector<16x192xf32>
    %cst_37 = arith.constant 1.000000e+00 : f32
    %113 = vector.broadcast %cst_37 : f32 to vector<16x192xf32>
    %114 = arith.addf %113, %112 : vector<16x192xf32>
    %115 = arith.divf %113, %114 : vector<16x192xf32>
    %116 = arith.mulf %115, %109 : vector<16x192xf32>
    %117 = arith.mulf %116, %110 : vector<16x192xf32>
    %c0_38 = arith.constant 0 : index
    %c0_39 = arith.constant 0 : index
    %118 = vector.load %arg8[%c0_38, %c0_39] : memref<192x64xf32, #tpu.memory_space<vmem>>, vector<192x64xf32>
    %cst_40 = arith.constant dense<0.000000e+00> : vector<16x64xf32>
    %119 = tpu.matmul %117, %118, %cst_40 {dimension_numbers = #tpu.dot_dimension_numbers<[1], [0], [0], [1], [0, 0, 1, 1], [], []>} : vector<16x192xf32>, vector<192x64xf32>, vector<16x64xf32> -> vector<16x64xf32>
    %120 = arith.addf %91, %119 : vector<16x64xf32>
    %c0_41 = arith.constant 0 : index
    %c0_42 = arith.constant 0 : index
    %121 = vector.load %arg11[%c0_41, %c0_42] : memref<16x64xf32, #tpu.memory_space<vmem>>, vector<16x64xf32>
    tpu.vector_store %arg11[%c0_41, %c0_42], %120 {strides = array<i32>} : memref<16x64xf32, #tpu.memory_space<vmem>>, vector<16x64xf32>,
    return
  }
  func.func @transform_0(%arg0: i32) -> (i32, i32) {
    %c0_i32 = arith.constant 0 : i32
    %c0_i32_0 = arith.constant 0 : i32
    %c0_i32_1 = arith.constant 0 : i32
    return %c0_i32, %c0_i32_0 : i32, i32
  }
  func.func @transform_1(%arg0: i32) -> (i32, i32) {
    %c0_i32 = arith.constant 0 : i32
    %c0_i32_0 = arith.constant 0 : i32
    %c0_i32_1 = arith.constant 0 : i32
    return %c0_i32, %c0_i32_0 : i32, i32
  }
  func.func @transform_2(%arg0: i32) -> (i32, i32) {
    %c0_i32 = arith.constant 0 : i32
    %c0_i32_0 = arith.constant 0 : i32
    %c0_i32_1 = arith.constant 0 : i32
    return %c0_i32, %c0_i32_0 : i32, i32
  }
  func.func @transform_3(%arg0: i32) -> (i32, i32) {
    %c0_i32 = arith.constant 0 : i32
    %c0_i32_0 = arith.constant 0 : i32
    %c0_i32_1 = arith.constant 0 : i32
    return %c0_i32, %c0_i32_0 : i32, i32
  }
  func.func @transform_4(%arg0: i32) -> (i32, i32) {
    %c0_i32 = arith.constant 0 : i32
    %c0_i32_0 = arith.constant 0 : i32
    %c0_i32_1 = arith.constant 0 : i32
    return %c0_i32, %c0_i32_0 : i32, i32
  }
  func.func @transform_5(%arg0: i32) -> (i32, i32) {
    %c0_i32 = arith.constant 0 : i32
    %c0_i32_0 = arith.constant 0 : i32
    %c0_i32_1 = arith.constant 0 : i32
    return %c0_i32, %c0_i32_0 : i32, i32
  }
  func.func @transform_6(%arg0: i32) -> (i32, i32) {
    %c0_i32 = arith.constant 0 : i32
    %c0_i32_0 = arith.constant 0 : i32
    %c0_i32_1 = arith.constant 0 : i32
    return %c0_i32, %c0_i32_0 : i32, i32
  }
  func.func @transform_7(%arg0: i32) -> (i32, i32) {
    %c0_i32 = arith.constant 0 : i32
    %c0_i32_0 = arith.constant 0 : i32
    %c0_i32_1 = arith.constant 0 : i32
    return %c0_i32, %c0_i32_0 : i32, i32
  }
  func.func @transform_8(%arg0: i32) -> (i32, i32) {
    %c0_i32 = arith.constant 0 : i32
    %c0_i32_0 = arith.constant 0 : i32
    %c0_i32_1 = arith.constant 0 : i32
    return %c0_i32, %c0_i32_0 : i32, i32
  }
  func.func @transform_9(%arg0: i32) -> (i32, i32) {
    %c0_i32 = arith.constant 0 : i32
    %c0_i32_0 = arith.constant 0 : i32
    %c0_i32_1 = arith.constant 0 : i32
    return %c0_i32, %c0_i32_0 : i32, i32
  }
  func.func @transform_10(%arg0: i32) -> (i32, i32) {
    %c0_i32 = arith.constant 0 : i32
    %c0_i32_0 = arith.constant 0 : i32
    %c0_i32_1 = arith.constant 0 : i32
    return %c0_i32, %c0_i32_0 : i32, i32
  }
}

</mosaic_0001>

<llo_original>
// kernel: transformer_block.1
$region0: #{transformer_block.1}
  #allocation0 [shape = 'u32[]', space=smem, size = 0x4, offset = 0x4, fixed_abs, tag = 'smem constant byte address 0x4 - core index']
  #allocation1 [shape = 'u32[144,128]{1,0:T(1,128)}', space=vmem, size = 0x12000, scoped, tag = 'internal scratch']
  %s0 = inlined_call_operand.vmem [shape: f32[16,48], index: 0, kind: input, shape index: {}]
  %s1 = inlined_call_operand.hbm [shape: f32[16,48], index: 1, kind: input, shape index: {}]
  %s2 = inlined_call_operand.vmem [shape: f32[64,64], index: 2, kind: input, shape index: {}]
  %s3 = inlined_call_operand.hbm [shape: f32[16,64], index: 3, kind: input, shape index: {}]
  %s4 = inlined_call_operand.vmem [shape: f32[64,128], index: 4, kind: input, shape index: {}]
  %s5 = inlined_call_operand.hbm [shape: f32[64,64], index: 5, kind: input, shape index: {}]
  %s6 = inlined_call_operand.vmem [shape: f32[64,384], index: 6, kind: input, shape index: {}]
  %s7 = inlined_call_operand.vmem [shape: f32[192,64], index: 7, kind: input, shape index: {}]
  %s8 = inlined_call_operand.vmem [shape: f32[1,64], index: 8, kind: input, shape index: {}]
  %s9 = inlined_call_operand.vmem [shape: f32[1,64], index: 9, kind: input, shape index: {}]
  %s10 = inlined_call_operand.hbm [shape: f32[16,64], index: 10, kind: output, shape index: {}]
  %s11 = sld [smem:[#allocation0]]
  $region62: #{transformer_block.1} parent=0
    _
  %s13 = ssub.s32 1, %s11
  %s14 = scalar_select 0, %s13, %s11
  $region1: #{transformer_block.1} parent=0
    #allocation2 [shape = 'u8[8192]{0}', space=vmem, size = 0x2000, scoped, tag = 'input window, operand 1, single buffered']
    #allocation3 [shape = 's32[1]{0}', space=sflag, size = 0x4, scoped, tag = 'scoped memory for transformer_block.1']
    #allocation4 [shape = 's32[1]{0}', space=sflag, size = 0x4, scoped, tag = 'scoped memory for transformer_block.1']
    #allocation5 [shape = 'u8[8192]{0}', space=vmem, size = 0x2000, scoped, tag = 'input window, operand 3, single buffered']
    #allocation6 [shape = 's32[1]{0}', space=sflag, size = 0x4, scoped, tag = 'scoped memory for transformer_block.1']
    #allocation7 [shape = 'u8[32768]{0}', space=vmem, size = 0x8000, scoped, tag = 'input window, operand 5, single buffered']
    #allocation8 [shape = 'u8[8192]{0}', space=vmem, size = 0x2000, scoped, tag = 'output window, operand 0, single buffered']
    %15 = vsyncpa [#allocation3], 0
    %16 = vsyncpa [#allocation6], 0
    %17 = vsyncpa [#allocation4], 0
    // Predicated region
    $region2: #{transformer_block.1} parent=1 // pred_check
      _
    $region3: #{transformer_block.1} parent=1 // pred_check_branch
      %19 = sbr.rel (0) target = $region5
    $region4: #{transformer_block.1} parent=1 // pred_region
      _
    $region5: #{transformer_block.1} parent=1 // pred_fallthru
      _
    // Predicated region
    $region6: #{transformer_block.1} parent=1 // pred_check
      _
    $region7: #{transformer_block.1} parent=1 // pred_check_branch
      %21 = sbr.rel (0) target = $region9
    $region8: #{transformer_block.1} parent=1 // pred_region
      %s23 = ssub.s32 256, 256
      %24 = vsyncadd [#allocation3], %s23
      %s25 = sshll.u32 [#allocation2], 4
      %s26 = int_to_ptr.vmem [resolvable:$true] %s25
      %31 = dma.hbm_to_vmem [thread:$0]  %s1, 256, %s26, [#allocation3], 128, 128, 8
    $region9: #{transformer_block.1} parent=1 // pred_fallthru
      _
    // Predicated region
    $region10: #{transformer_block.1} parent=1 // pred_check
      _
    $region11: #{transformer_block.1} parent=1 // pred_check_branch
      %33 = sbr.rel (0) target = $region13
    $region12: #{transformer_block.1} parent=1 // pred_region
      _
    $region13: #{transformer_block.1} parent=1 // pred_fallthru
      _
    // Predicated region
    $region14: #{transformer_block.1} parent=1 // pred_check
      _
    $region15: #{transformer_block.1} parent=1 // pred_check_branch
      %35 = sbr.rel (0) target = $region17
    $region16: #{transformer_block.1} parent=1 // pred_region
      %s37 = ssub.s32 256, 256
      %38 = vsyncadd [#allocation6], %s37
      %s39 = sshll.u32 [#allocation5], 4
      %s40 = int_to_ptr.vmem [resolvable:$true] %s39
      %45 = dma.hbm_to_vmem [thread:$0]  %s3, 256, %s40, [#allocation6], 128, 128, 8
    $region17: #{transformer_block.1} parent=1 // pred_fallthru
      _
    // Predicated region
    $region18: #{transformer_block.1} parent=1 // pred_check
      _
    $region19: #{transformer_block.1} parent=1 // pred_check_branch
      %47 = sbr.rel (0) target = $region21
    $region20: #{transformer_block.1} parent=1 // pred_region
      _
    $region21: #{transformer_block.1} parent=1 // pred_fallthru
      _
    // Predicated region
    $region22: #{transformer_block.1} parent=1 // pred_check
      _
    $region23: #{transformer_block.1} parent=1 // pred_check_branch
      %49 = sbr.rel (0) target = $region25
    $region24: #{transformer_block.1} parent=1 // pred_region
      %s51 = ssub.s32 1024, 1024
      %52 = vsyncadd [#allocation6], %s51
      %s53 = sshll.u32 [#allocation7], 4
      %s54 = int_to_ptr.vmem [resolvable:$true] %s53
      %59 = dma.hbm_to_vmem [thread:$0]  %s5, 1024, %s54, [#allocation6], 128, 128, 8
    $region25: #{transformer_block.1} parent=1 // pred_fallthru
      _
    // Predicated region
    $region26: #{transformer_block.1} parent=1 // pred_check
      _
    $region27: #{transformer_block.1} parent=1 // pred_check_branch
      %61 = sbr.rel (0) target = $region29
    $region28: #{transformer_block.1} parent=1 // pred_region
      _
    $region29: #{transformer_block.1} parent=1 // pred_fallthru
      _
    // Predicated region
    $region30: #{transformer_block.1} parent=1 // pred_check
      _
    $region31: #{transformer_block.1} parent=1 // pred_check_branch
      %63 = sbr.rel (0) target = $region33
    $region32: #{transformer_block.1} parent=1 // pred_region
      _
    $region33: #{transformer_block.1} parent=1 // pred_fallthru
      _
    // Predicated region
    $region34: #{transformer_block.1} parent=1 // pred_check
      _
    $region35: #{transformer_block.1} parent=1 // pred_check_branch
      %65 = sbr.rel (0) target = $region37
    $region36: #{transformer_block.1} parent=1 // pred_region
      _
    $region37: #{transformer_block.1} parent=1 // pred_fallthru
      _
    // Predicated region
    $region38: #{transformer_block.1} parent=1 // pred_check
      _
    $region39: #{transformer_block.1} parent=1 // pred_check_branch
      %67 = sbr.rel (0) target = $region41
    $region40: #{transformer_block.1} parent=1 // pred_region
      _
    $region41: #{transformer_block.1} parent=1 // pred_fallthru
      _
    // Predicated region
    $region42: #{transformer_block.1} parent=1 // pred_check
      _
    $region43: #{transformer_block.1} parent=1 // pred_check_branch
      %69 = sbr.rel (0) target = $region45
    $region44: #{transformer_block.1} parent=1 // pred_region
      %70 = dma.done [#allocation3], 256
    $region45: #{transformer_block.1} parent=1 // pred_fallthru
      _
    // Predicated region
    $region46: #{transformer_block.1} parent=1 // pred_check
      _
    $region47: #{transformer_block.1} parent=1 // pred_check_branch
      %72 = sbr.rel (0) target = $region49
    $region48: #{transformer_block.1} parent=1 // pred_region
      %73 = dma.done [#allocation6], 256
    $region49: #{transformer_block.1} parent=1 // pred_fallthru
      _
    // Predicated region
    $region50: #{transformer_block.1} parent=1 // pred_check
      _
    $region51: #{transformer_block.1} parent=1 // pred_check_branch
      %75 = sbr.rel (0) target = $region53
    $region52: #{transformer_block.1} parent=1 // pred_region
      %76 = dma.done [#allocation6], 1024
    $region53: #{transformer_block.1} parent=1 // pred_fallthru
      _
    %v77 = vld [vmem:[#allocation5] sm:$0xff]
    %v78 = vld [vmem:[#allocation5 + $0x8] sm:$0xff]
    %v79 = vld [vmem:[%s8] sm:$0x1]
    %v80 = vmul.f32 %v77, %v77
    %v81 = vmul.f32 %v78, %v78
    %vm82 = vcmask 523264
    %v83 = vsel %vm82, %v80, 0.0
    %84 = vadd.xlane.f32.xlu0 %v83
    %v85 = vpop.xlane.xlu0 %84
    %v86 = vsel %vm82, %v81, 0.0
    %87 = vadd.xlane.f32.xlu0 %v86
    %v88 = vpop.xlane.xlu0 %87
    %v89 = vrcp.pop 64.0
    %v90 = vmul.f32 %v85, %v89
    %v91 = vmul.f32 %v88, %v89
    %v92 = vadd.f32 %v90, 1e-05
    %v93 = vadd.f32 %v91, 1e-05
    %v94 = vrsqrt.pop %v92
    %v95 = vrsqrt.pop %v93
    %v96 = vmul.f32 %v77, %v94
    %v97 = vmul.f32 %v78, %v95
    %v99 = vlaneseq
    %v100 = vshrl.u32 %v99, 7
    %v101 = vsub.s32 0, %v100
    %v102 = vrot.slane %v79, %v101
    %v104 = vmul.f32 %v96, %v102
    %v105 = vmul.f32 %v97, %v102
    %v106 = vld [vmem:[%s4] sm:$0xff]
    %v107 = vld [vmem:[%s4 + $0x8] sm:$0xff]
    %v108 = vld [vmem:[%s4 + $0x10] sm:$0xff]
    %v109 = vld [vmem:[%s4 + $0x18] sm:$0xff]
    %v110 = vld [vmem:[%s4 + $0x20] sm:$0xff]
    %v111 = vld [vmem:[%s4 + $0x28] sm:$0xff]
    %v112 = vld [vmem:[%s4 + $0x30] sm:$0xff]
    %v113 = vld [vmem:[%s4 + $0x38] sm:$0xff]
    %v115 = vsel %vm82, %v104, 0
    %v118 = vsel %vm82, %v105, 0
    %120 = vmatprep.subr.mxu0 0.0
    %121 = vmatpush1.msra.mxu0 %v106
    %122 = vmatprep.subr.mxu0 0.0
    %123 = vmatpush1.msra.mxu0 %v107
    %124 = vmatprep.subr.mxu0 0.0
    %125 = vmatpush1.msra.mxu0 %v108
    %126 = vmatprep.subr.mxu0 0.0
    %127 = vmatpush1.msra.mxu0 %v109
    %128 = vmatprep.subr.mxu0 0.0
    %129 = vmatpush1.msra.mxu0 %v110
    %130 = vmatprep.subr.mxu0 0.0
    %131 = vmatpush1.msra.mxu0 %v111
    %132 = vmatprep.subr.mxu0 0.0
    %133 = vmatpush1.msra.mxu0 %v112
    %134 = vmatprep.subr.mxu0 0.0
    %135 = vmatpush1.msra.mxu0 %v113
    %136 = vmatprep.subr.mxu0 0.0
    %137 = vmatpush1.msra.mxu0 0.0
    %138 = vmatprep.subr.mxu0 0.0
    %139 = vmatpush1.msra.mxu0 0.0
    %140 = vmatprep.subr.mxu0 0.0
    %141 = vmatpush1.msra.mxu0 0.0
    %142 = vmatprep.subr.mxu0 0.0
    %143 = vmatpush1.msra.mxu0 0.0
    %144 = vmatprep.subr.mxu0 0.0
    %145 = vmatpush1.msra.mxu0 0.0
    %146 = vmatprep.subr.mxu0 0.0
    %147 = vmatpush1.msra.mxu0 0.0
    %148 = vmatprep.subr.mxu0 0.0
    %149 = vmatpush1.msra.mxu0 0.0
    %150 = vmatprep.subr.mxu0 0.0
    %151 = vmatpush1.msra.mxu0 0.0
    %152 = vmatprep.subr.mxu0 0.0
    %153 = vmatpush1.msra.mxu0 0.0
    %154 = vmatprep.subr.mxu0 0.0
    %155 = vmatpush1.msra.mxu0 0.0
    %156 = vmatprep.subr.mxu0 0.0
    %157 = vmatpush1.msra.mxu0 0.0
    %158 = vmatprep.subr.mxu0 0.0
    %159 = vmatpush1.msra.mxu0 0.0
    %160 = vmatprep.subr.mxu0 0.0
    %161 = vmatpush1.msra.mxu0 0.0
    %162 = vmatprep.subr.mxu0 0.0
    %163 = vmatpush1.msra.mxu0 0.0
    %164 = vmatprep.subr.mxu0 0.0
    %165 = vmatpush1.msra.mxu0 0.0
    %166 = vmatprep.subr.mxu0 0.0
    %167 = vmatpush1.msra.mxu0 0.0
    %168 = vmatprep.subr.mxu0 0.0
    %169 = vmatpush1.msra.mxu0 0.0
    %170 = vmatprep.subr.mxu0 0.0
    %171 = vmatpush1.msra.mxu0 0.0
    %172 = vmatprep.subr.mxu0 0.0
    %173 = vmatpush1.msra.mxu0 0.0
    %174 = vmatprep.subr.mxu0 0.0
    %175 = vmatpush1.msra.mxu0 0.0
    %176 = vmatprep.subr.mxu0 0.0
    %177 = vmatpush1.msra.mxu0 0.0
    %178 = vmatprep.subr.mxu0 0.0
    %179 = vmatpush1.msra.mxu0 0.0
    %180 = vmatprep.subr.mxu0 0.0
    %181 = vmatpush1.msra.mxu0 0.0
    %182 = vmatprep.subr.mxu0 0.0
    %183 = vmatpush1.msra.mxu0 0.0
    %184 = vmatprep.mubr.f32.mxu0 0.0
    %185 = vmatmul.mubr.f32.gmra.mrb[0].mxu0 %v115
    %v186 = vpop.f32.mrb[0].mxu0
    %v187 = vadd.f32 0.0, %v186
    %v188 = vpop.f32.mrb[0].mxu0
    %189 = vmatprep.mubr.f32.mxu0 0.0
    %190 = vmatmul.mubr.f32.gmra.mrb[0].mxu0 %v118
    %v191 = vpop.f32.mrb[0].mxu0
    %v192 = vadd.f32 0.0, %v191
    %v193 = vpop.f32.mrb[0].mxu0
    %194 = vdwg.mxu0
    %v195 = vld [vmem:[%s0] sm:$0xff]
    %v196 = vld [vmem:[%s0 + $0x8] sm:$0xff]
    %v197 = vld [vmem:[#allocation2] sm:$0xff]
    %v198 = vld [vmem:[#allocation2 + $0x8] sm:$0xff]
    %v199 = vmul.f32 %v187, %v195
    %v200 = vmul.f32 %v192, %v196
    %203 = vrot.lane.b32.xlu0 %v197, 48
    %v204 = vpop.permute.xlu0 %203
    %205 = vrot.lane.b32.xlu0 %v198, 48
    %v206 = vpop.permute.xlu0 %205
    %v209 = vmul.f32 %v187, %v204
    %v210 = vmul.f32 %v192, %v206
    %213 = vrot.lane.b32.xlu0 %v209, 80
    %v214 = vpop.permute.xlu0 %213
    %215 = vrot.lane.b32.xlu0 %v210, 80
    %v216 = vpop.permute.xlu0 %215
    %v219 = vsub.f32 %v199, %v214
    %v220 = vsub.f32 %v200, %v216
    %v221 = vmul.f32 %v187, %v197
    %v222 = vmul.f32 %v192, %v198
    %225 = vrot.lane.b32.xlu0 %v195, 48
    %v226 = vpop.permute.xlu0 %225
    %227 = vrot.lane.b32.xlu0 %v196, 48
    %v228 = vpop.permute.xlu0 %227
    %v231 = vmul.f32 %v187, %v226
    %v232 = vmul.f32 %v192, %v228
    %235 = vrot.lane.b32.xlu0 %v231, 80
    %v236 = vpop.permute.xlu0 %235
    %237 = vrot.lane.b32.xlu0 %v232, 80
    %v238 = vpop.permute.xlu0 %237
    %v241 = vadd.f32 %v221, %v236
    %v242 = vadd.f32 %v222, %v238
    %245 = vrot.lane.b32.xlu0 %v219, 120
    %v246 = vpop.permute.xlu0 %245
    %247 = vrot.lane.b32.xlu0 %v220, 120
    %v248 = vpop.permute.xlu0 %247
    %249 = vrot.lane.b32.xlu0 %v219, 112
    %v250 = vpop.permute.xlu0 %249
    %251 = vrot.lane.b32.xlu0 %v220, 112
    %v252 = vpop.permute.xlu0 %251
    %253 = vrot.lane.b32.xlu0 %v219, 104
    %v254 = vpop.permute.xlu0 %253
    %255 = vrot.lane.b32.xlu0 %v220, 104
    %v256 = vpop.permute.xlu0 %255
    %259 = vrot.lane.b32.xlu0 %v241, 120
    %v260 = vpop.permute.xlu0 %259
    %261 = vrot.lane.b32.xlu0 %v242, 120
    %v262 = vpop.permute.xlu0 %261
    %263 = vrot.lane.b32.xlu0 %v241, 112
    %v264 = vpop.permute.xlu0 %263
    %265 = vrot.lane.b32.xlu0 %v242, 112
    %v266 = vpop.permute.xlu0 %265
    %267 = vrot.lane.b32.xlu0 %v241, 104
    %v268 = vpop.permute.xlu0 %267
    %269 = vrot.lane.b32.xlu0 %v242, 104
    %v270 = vpop.permute.xlu0 %269
    %273 = vrot.lane.b32.xlu0 %v187, 112
    %v274 = vpop.permute.xlu0 %273
    %275 = vrot.lane.b32.xlu0 %v192, 112
    %v276 = vpop.permute.xlu0 %275
    %277 = vrot.lane.b32.xlu0 %v241, 96
    %v278 = vpop.permute.xlu0 %277
    %279 = vrot.lane.b32.xlu0 %v242, 96
    %v280 = vpop.permute.xlu0 %279
    %281 = vrot.lane.b32.xlu0 %v260, 96
    %v282 = vpop.permute.xlu0 %281
    %283 = vrot.lane.b32.xlu0 %v262, 96
    %v284 = vpop.permute.xlu0 %283
    %vm285 = vcmask 64512
    %v286 = vsel %vm285, %v241, 0
    %v288 = vsel %vm285, %v242, 0
    %v290 = vsel %vm285, %v260, 0
    %v292 = vsel %vm285, %v262, 0
    %v294 = vsel %vm285, %v264, 0
    %v296 = vsel %vm285, %v266, 0
    %v298 = vsel %vm285, %v268, 0
    %v300 = vsel %vm285, %v270, 0
    %v302 = vsel %vm285, %v278, 0
    %v304 = vsel %vm285, %v280, 0
    %v306 = vsel %vm285, %v282, 0
    %v308 = vsel %vm285, %v284, 0
    %310 = vmatprep.subr.mxu0 0.0
    %311 = vmatpush1.xpose.msra.mxu0 %v302
    %312 = vmatprep.subr.mxu0 0.0
    %313 = vmatpush1.xpose.msra.mxu0 %v304
    %314 = vmatprep.subr.mxu0 0.0
    %315 = vmatpush1.xpose.msra.mxu0 %v302
    %316 = vmatprep.subr.mxu0 0.0
    %317 = vmatpush1.xpose.msra.mxu0 %v304
    %318 = vmatprep.subr.mxu0 0.0
    %319 = vmatpush1.xpose.msra.mxu0 %v306
    %320 = vmatprep.subr.mxu0 0.0
    %321 = vmatpush1.xpose.msra.mxu0 %v308
    %322 = vmatprep.subr.mxu0 0.0
    %323 = vmatpush1.xpose.msra.mxu0 %v306
    %324 = vmatprep.subr.mxu0 0.0
    %325 = vmatpush1.xpose.msra.mxu0 %v308
    %326 = vmatprep.subr.mxu0 0.0
    %327 = vmatpush1.xpose.msra.mxu0 0.0
    %328 = vmatprep.subr.mxu0 0.0
    %329 = vmatpush1.xpose.msra.mxu0 0.0
    %330 = vmatprep.subr.mxu0 0.0
    %331 = vmatpush1.xpose.msra.mxu0 0.0
    %332 = vmatprep.subr.mxu0 0.0
    %333 = vmatpush1.xpose.msra.mxu0 0.0
    %334 = vmatprep.subr.mxu0 0.0
    %335 = vmatpush1.xpose.msra.mxu0 0.0
    %336 = vmatprep.subr.mxu0 0.0
    %337 = vmatpush1.xpose.msra.mxu0 0.0
    %338 = vmatprep.subr.mxu0 0.0
    %339 = vmatpush1.xpose.msra.mxu0 0.0
    %340 = vmatprep.subr.mxu0 0.0
    %341 = vmatpush1.xpose.msra.mxu0 0.0
    %342 = vmatprep.subr.mxu0 0.0
    %343 = vmatpush1.xpose.msra.mxu0 0.0
    %344 = vmatprep.subr.mxu0 0.0
    %345 = vmatpush1.xpose.msra.mxu0 0.0
    %346 = vmatprep.subr.mxu0 0.0
    %347 = vmatpush1.xpose.msra.mxu0 0.0
    %348 = vmatprep.subr.mxu0 0.0
    %349 = vmatpush1.xpose.msra.mxu0 0.0
    %350 = vmatprep.subr.mxu0 0.0
    %351 = vmatpush1.xpose.msra.mxu0 0.0
    %352 = vmatprep.subr.mxu0 0.0
    %353 = vmatpush1.xpose.msra.mxu0 0.0
    %354 = vmatprep.subr.mxu0 0.0
    %355 = vmatpush1.xpose.msra.mxu0 0.0
    %356 = vmatprep.subr.mxu0 0.0
    %357 = vmatpush1.xpose.msra.mxu0 0.0
    %358 = vmatprep.subr.mxu0 0.0
    %359 = vmatpush1.xpose.msra.mxu0 0.0
    %360 = vmatprep.subr.mxu0 0.0
    %361 = vmatpush1.xpose.msra.mxu0 0.0
    %362 = vmatprep.subr.mxu0 0.0
    %363 = vmatpush1.xpose.msra.mxu0 0.0
    %364 = vmatprep.subr.mxu0 0.0
    %365 = vmatpush1.xpose.msra.mxu0 0.0
    %366 = vmatprep.subr.mxu0 0.0
    %367 = vmatpush1.xpose.msra.mxu0 0.0
    %368 = vmatprep.subr.mxu0 0.0
    %369 = vmatpush1.xpose.msra.mxu0 0.0
    %370 = vmatprep.subr.mxu0 0.0
    %371 = vmatpush1.xpose.msra.mxu0 0.0
    %372 = vmatprep.subr.mxu0 0.0
    %373 = vmatpush1.xpose.msra.mxu0 0.0
    %374 = vmatprep.mubr.f32.mxu0 0.0
    %375 = vmatmul.mubr.f32.gmra.mrb[0].mxu0 %v286
    %v376 = vpop.f32.mrb[0].mxu0
    %v377 = vadd.f32 0.0, %v376
    %v378 = vpop.f32.mrb[0].mxu0
    %379 = vmatprep.mubr.f32.mxu0 0.0
    %380 = vmatmul.mubr.f32.gmra.mrb[0].mxu0 %v288
    %v381 = vpop.f32.mrb[0].mxu0
    %v382 = vadd.f32 0.0, %v381
    %v383 = vpop.f32.mrb[0].mxu0
    %384 = vmatprep.mubr.f32.mxu0 0.0
    %385 = vmatmul.mubr.f32.gmra.mrb[0].mxu0 %v290
    %v386 = vpop.f32.mrb[0].mxu0
    %v387 = vadd.f32 0.0, %v386
    %v388 = vpop.f32.mrb[0].mxu0
    %389 = vmatprep.mubr.f32.mxu0 0.0
    %390 = vmatmul.mubr.f32.gmra.mrb[0].mxu0 %v292
    %v391 = vpop.f32.mrb[0].mxu0
    %v392 = vadd.f32 0.0, %v391
    %v393 = vpop.f32.mrb[0].mxu0
    %394 = vmatprep.mubr.f32.mxu0 0.0
    %395 = vmatmul.mubr.f32.gmra.mrb[0].mxu0 %v294
    %v396 = vpop.f32.mrb[0].mxu0
    %v397 = vadd.f32 0.0, %v396
    %v398 = vpop.f32.mrb[0].mxu0
    %399 = vmatprep.mubr.f32.mxu0 0.0
    %400 = vmatmul.mubr.f32.gmra.mrb[0].mxu0 %v296
    %v401 = vpop.f32.mrb[0].mxu0
    %v402 = vadd.f32 0.0, %v401
    %v403 = vpop.f32.mrb[0].mxu0
    %404 = vmatprep.mubr.f32.mxu0 0.0
    %405 = vmatmul.mubr.f32.gmra.mrb[0].mxu0 %v298
    %v406 = vpop.f32.mrb[0].mxu0
    %v407 = vadd.f32 0.0, %v406
    %v408 = vpop.f32.mrb[0].mxu0
    %409 = vmatprep.mubr.f32.mxu0 0.0
    %410 = vmatmul.mubr.f32.gmra.mrb[0].mxu0 %v300
    %v411 = vpop.f32.mrb[0].mxu0
    %v412 = vadd.f32 0.0, %v411
    %v413 = vpop.f32.mrb[0].mxu0
    %414 = vdwg.mxu0
    %415 = vrot.lane.b32.xlu0 %v219, 96
    %v416 = vpop.permute.xlu0 %415
    %417 = vrot.lane.b32.xlu0 %v220, 96
    %v418 = vpop.permute.xlu0 %417
    %419 = vrot.lane.b32.xlu0 %v246, 96
    %v420 = vpop.permute.xlu0 %419
    %421 = vrot.lane.b32.xlu0 %v248, 96
    %v422 = vpop.permute.xlu0 %421
    %v423 = vsel %vm285, %v219, 0
    %v425 = vsel %vm285, %v220, 0
    %v427 = vsel %vm285, %v246, 0
    %v429 = vsel %vm285, %v248, 0
    %v431 = vsel %vm285, %v250, 0
    %v433 = vsel %vm285, %v252, 0
    %v435 = vsel %vm285, %v254, 0
    %v437 = vsel %vm285, %v256, 0
    %v439 = vsel %vm285, %v416, 0
    %v441 = vsel %vm285, %v418, 0
    %v443 = vsel %vm285, %v420, 0
    %v445 = vsel %vm285, %v422, 0
    %447 = vmatprep.subr.mxu0 0.0
    %448 = vmatpush1.xpose.msra.mxu0 %v439
    %449 = vmatprep.subr.mxu0 0.0
    %450 = vmatpush1.xpose.msra.mxu0 %v441
    %451 = vmatprep.subr.mxu0 0.0
    %452 = vmatpush1.xpose.msra.mxu0 %v439
    %453 = vmatprep.subr.mxu0 0.0
    %454 = vmatpush1.xpose.msra.mxu0 %v441
    %455 = vmatprep.subr.mxu0 0.0
    %456 = vmatpush1.xpose.msra.mxu0 %v443
    %457 = vmatprep.subr.mxu0 0.0
    %458 = vmatpush1.xpose.msra.mxu0 %v445
    %459 = vmatprep.subr.mxu0 0.0
    %460 = vmatpush1.xpose.msra.mxu0 %v443
    %461 = vmatprep.subr.mxu0 0.0
    %462 = vmatpush1.xpose.msra.mxu0 %v445
    %463 = vmatprep.subr.mxu0 0.0
    %464 = vmatpush1.xpose.msra.mxu0 0.0
    %465 = vmatprep.subr.mxu0 0.0
    %466 = vmatpush1.xpose.msra.mxu0 0.0
    %467 = vmatprep.subr.mxu0 0.0
    %468 = vmatpush1.xpose.msra.mxu0 0.0
    %469 = vmatprep.subr.mxu0 0.0
    %470 = vmatpush1.xpose.msra.mxu0 0.0
    %471 = vmatprep.subr.mxu0 0.0
    %472 = vmatpush1.xpose.msra.mxu0 0.0
    %473 = vmatprep.subr.mxu0 0.0
    %474 = vmatpush1.xpose.msra.mxu0 0.0
    %475 = vmatprep.subr.mxu0 0.0
    %476 = vmatpush1.xpose.msra.mxu0 0.0
    %477 = vmatprep.subr.mxu0 0.0
    %478 = vmatpush1.xpose.msra.mxu0 0.0
    %479 = vmatprep.subr.mxu0 0.0
    %480 = vmatpush1.xpose.msra.mxu0 0.0
    %481 = vmatprep.subr.mxu0 0.0
    %482 = vmatpush1.xpose.msra.mxu0 0.0
    %483 = vmatprep.subr.mxu0 0.0
    %484 = vmatpush1.xpose.msra.mxu0 0.0
    %485 = vmatprep.subr.mxu0 0.0
    %486 = vmatpush1.xpose.msra.mxu0 0.0
    %487 = vmatprep.subr.mxu0 0.0
    %488 = vmatpush1.xpose.msra.mxu0 0.0
    %489 = vmatprep.subr.mxu0 0.0
    %490 = vmatpush1.xpose.msra.mxu0 0.0
    %491 = vmatprep.subr.mxu0 0.0
    %492 = vmatpush1.xpose.msra.mxu0 0.0
    %493 = vmatprep.subr.mxu0 0.0
    %494 = vmatpush1.xpose.msra.mxu0 0.0
    %495 = vmatprep.subr.mxu0 0.0
    %496 = vmatpush1.xpose.msra.mxu0 0.0
    %497 = vmatprep.subr.mxu0 0.0
    %498 = vmatpush1.xpose.msra.mxu0 0.0
    %499 = vmatprep.subr.mxu0 0.0
    %500 = vmatpush1.xpose.msra.mxu0 0.0
    %501 = vmatprep.subr.mxu0 0.0
    %502 = vmatpush1.xpose.msra.mxu0 0.0
    %503 = vmatprep.subr.mxu0 0.0
    %504 = vmatpush1.xpose.msra.mxu0 0.0
    %505 = vmatprep.subr.mxu0 0.0
    %506 = vmatpush1.xpose.msra.mxu0 0.0
    %507 = vmatprep.subr.mxu0 0.0
    %508 = vmatpush1.xpose.msra.mxu0 0.0
    %509 = vmatprep.subr.mxu0 0.0
    %510 = vmatpush1.xpose.msra.mxu0 0.0
    %511 = vmatprep.mubr.f32.mxu0 0.0
    %512 = vmatmul.mubr.f32.gmra.mrb[0].mxu0 %v423
    %v513 = vpop.f32.mrb[0].mxu0
    %v514 = vadd.f32 %v377, %v513
    %v515 = vpop.f32.mrb[0].mxu0
    %516 = vmatprep.mubr.f32.mxu0 0.0
    %517 = vmatmul.mubr.f32.gmra.mrb[0].mxu0 %v425
    %v518 = vpop.f32.mrb[0].mxu0
    %v519 = vadd.f32 %v382, %v518
    %v520 = vpop.f32.mrb[0].mxu0
    %521 = vmatprep.mubr.f32.mxu0 0.0
    %522 = vmatmul.mubr.f32.gmra.mrb[0].mxu0 %v427
    %v523 = vpop.f32.mrb[0].mxu0
    %v524 = vadd.f32 %v387, %v523
    %v525 = vpop.f32.mrb[0].mxu0
    %526 = vmatprep.mubr.f32.mxu0 0.0
    %527 = vmatmul.mubr.f32.gmra.mrb[0].mxu0 %v429
    %v528 = vpop.f32.mrb[0].mxu0
    %v529 = vadd.f32 %v392, %v528
    %v530 = vpop.f32.mrb[0].mxu0
    %531 = vmatprep.mubr.f32.mxu0 0.0
    %532 = vmatmul.mubr.f32.gmra.mrb[0].mxu0 %v431
    %v533 = vpop.f32.mrb[0].mxu0
    %v534 = vadd.f32 %v397, %v533
    %v535 = vpop.f32.mrb[0].mxu0
    %536 = vmatprep.mubr.f32.mxu0 0.0
    %537 = vmatmul.mubr.f32.gmra.mrb[0].mxu0 %v433
    %v538 = vpop.f32.mrb[0].mxu0
    %v539 = vadd.f32 %v402, %v538
    %v540 = vpop.f32.mrb[0].mxu0
    %541 = vmatprep.mubr.f32.mxu0 0.0
    %542 = vmatmul.mubr.f32.gmra.mrb[0].mxu0 %v435
    %v543 = vpop.f32.mrb[0].mxu0
    %v544 = vadd.f32 %v407, %v543
    %v545 = vpop.f32.mrb[0].mxu0
    %546 = vmatprep.mubr.f32.mxu0 0.0
    %547 = vmatmul.mubr.f32.gmra.mrb[0].mxu0 %v437
    %v548 = vpop.f32.mrb[0].mxu0
    %v549 = vadd.f32 %v412, %v548
    %v550 = vpop.f32.mrb[0].mxu0
    %551 = vdwg.mxu0
    %v552 = vmul.f32 %v514, 0.25
    %v553 = vmul.f32 %v519, 0.25
    %v554 = vmul.f32 %v524, 0.25
    %v555 = vmul.f32 %v529, 0.25
    %v556 = vmul.f32 %v534, 0.25
    %v557 = vmul.f32 %v539, 0.25
    %v558 = vmul.f32 %v544, 0.25
    %v559 = vmul.f32 %v549, 0.25
    %v560 = vld [vmem:[%s2] sm:$0xff]
    %v561 = vld [vmem:[%s2 + $0x8] sm:$0xff]
    %v562 = vld [vmem:[%s2 + $0x10] sm:$0xff]
    %v563 = vld [vmem:[%s2 + $0x18] sm:$0xff]
    %v564 = vld [vmem:[%s2 + $0x20] sm:$0xff]
    %v565 = vld [vmem:[%s2 + $0x28] sm:$0xff]
    %v566 = vld [vmem:[%s2 + $0x30] sm:$0xff]
    %v567 = vld [vmem:[%s2 + $0x38] sm:$0xff]
    %v568 = vadd.f32 %v552, %v560
    %v569 = vadd.f32 %v553, %v561
    %v570 = vadd.f32 %v554, %v562
    %v571 = vadd.f32 %v555, %v563
    %v572 = vadd.f32 %v556, %v564
    %v573 = vadd.f32 %v557, %v565
    %v574 = vadd.f32 %v558, %v566
    %v575 = vadd.f32 %v559, %v567
    %v576 = vsel %vm82, %v568, -inf
    %577 = vmax.xlane.f32.xlu0 %v576
    %v578 = vpop.xlane.xlu0 %577
    %v579 = vsel %vm82, %v569, -inf
    %580 = vmax.xlane.f32.xlu0 %v579
    %v581 = vpop.xlane.xlu0 %580
    %v582 = vsel %vm82, %v570, -inf
    %583 = vmax.xlane.f32.xlu0 %v582
    %v584 = vpop.xlane.xlu0 %583
    %v585 = vsel %vm82, %v571, -inf
    %586 = vmax.xlane.f32.xlu0 %v585
    %v587 = vpop.xlane.xlu0 %586
    %v588 = vsel %vm82, %v572, -inf
    %589 = vmax.xlane.f32.xlu0 %v588
    %v590 = vpop.xlane.xlu0 %589
    %v591 = vsel %vm82, %v573, -inf
    %592 = vmax.xlane.f32.xlu0 %v591
    %v593 = vpop.xlane.xlu0 %592
    %v594 = vsel %vm82, %v574, -inf
    %595 = vmax.xlane.f32.xlu0 %v594
    %v596 = vpop.xlane.xlu0 %595
    %v597 = vsel %vm82, %v575, -inf
    %598 = vmax.xlane.f32.xlu0 %v597
    %v599 = vpop.xlane.xlu0 %598
    %v600 = vsub.f32 %v568, %v578
    %v601 = vsub.f32 %v569, %v581
    %v602 = vsub.f32 %v570, %v584
    %v603 = vsub.f32 %v571, %v587
    %v604 = vsub.f32 %v572, %v590
    %v605 = vsub.f32 %v573, %v593
    %v606 = vsub.f32 %v574, %v596
    %v607 = vsub.f32 %v575, %v599
    %v608 = vmul.f32 %v600, 1.442695
    %v609 = vpow.pop %v608
    %v610 = vmul.f32 %v601, 1.442695
    %v611 = vpow.pop %v610
    %v612 = vmul.f32 %v602, 1.442695
    %v613 = vpow.pop %v612
    %v614 = vmul.f32 %v603, 1.442695
    %v615 = vpow.pop %v614
    %v616 = vmul.f32 %v604, 1.442695
    %v617 = vpow.pop %v616
    %v618 = vmul.f32 %v605, 1.442695
    %v619 = vpow.pop %v618
    %v620 = vmul.f32 %v606, 1.442695
    %v621 = vpow.pop %v620
    %v622 = vmul.f32 %v607, 1.442695
    %v623 = vpow.pop %v622
    %v624 = vsel %vm82, %v609, 0.0
    %625 = vadd.xlane.f32.xlu0 %v624
    %v626 = vpop.xlane.xlu0 %625
    %v627 = vsel %vm82, %v611, 0.0
    %628 = vadd.xlane.f32.xlu0 %v627
    %v629 = vpop.xlane.xlu0 %628
    %v630 = vsel %vm82, %v613, 0.0
    %631 = vadd.xlane.f32.xlu0 %v630
    %v632 = vpop.xlane.xlu0 %631
    %v633 = vsel %vm82, %v615, 0.0
    %634 = vadd.xlane.f32.xlu0 %v633
    %v635 = vpop.xlane.xlu0 %634
    %v636 = vsel %vm82, %v617, 0.0
    %637 = vadd.xlane.f32.xlu0 %v636
    %v638 = vpop.xlane.xlu0 %637
    %v639 = vsel %vm82, %v619, 0.0
    %640 = vadd.xlane.f32.xlu0 %v639
    %v641 = vpop.xlane.xlu0 %640
    %v642 = vsel %vm82, %v621, 0.0
    %643 = vadd.xlane.f32.xlu0 %v642
    %v644 = vpop.xlane.xlu0 %643
    %v645 = vsel %vm82, %v623, 0.0
    %646 = vadd.xlane.f32.xlu0 %v645
    %v647 = vpop.xlane.xlu0 %646
    %v648 = vrcp.pop %v626
    %v649 = vrcp.pop %v629
    %v650 = vrcp.pop %v632
    %v651 = vrcp.pop %v635
    %v652 = vrcp.pop %v638
    %v653 = vrcp.pop %v641
    %v654 = vrcp.pop %v644
    %v655 = vrcp.pop %v647
    %v656 = vmul.f32 %v609, %v648
    %v657 = vmul.f32 %v611, %v649
    %v658 = vmul.f32 %v613, %v650
    %v659 = vmul.f32 %v615, %v651
    %v660 = vmul.f32 %v617, %v652
    %v661 = vmul.f32 %v619, %v653
    %v662 = vmul.f32 %v621, %v654
    %v663 = vmul.f32 %v623, %v655
    %664 = vrot.lane.b32.xlu0 %v187, 32
    %v665 = vpop.permute.xlu0 %664
    %666 = vrot.lane.b32.xlu0 %v192, 32
    %v667 = vpop.permute.xlu0 %666
    %668 = vrot.lane.b32.xlu0 %v274, 32
    %v669 = vpop.permute.xlu0 %668
    %670 = vrot.lane.b32.xlu0 %v276, 32
    %v671 = vpop.permute.xlu0 %670
    %v677 = vsel %vm82, %v656, 0
    %v680 = vsel %vm82, %v657, 0
    %v683 = vsel %vm82, %v658, 0
    %v686 = vsel %vm82, %v659, 0
    %v689 = vsel %vm82, %v660, 0
    %v692 = vsel %vm82, %v661, 0
    %v695 = vsel %vm82, %v662, 0
    %v698 = vsel %vm82, %v663, 0
    %700 = vmatprep.subr.mxu0 0.0
    %701 = vmatpush1.msra.mxu0 %v665
    %702 = vmatprep.subr.mxu0 0.0
    %703 = vmatpush1.msra.mxu0 %v667
    %704 = vmatprep.subr.mxu0 0.0
    %705 = vmatpush1.msra.mxu0 %v665
    %706 = vmatprep.subr.mxu0 0.0
    %707 = vmatpush1.msra.mxu0 %v667
    %708 = vmatprep.subr.mxu0 0.0
    %709 = vmatpush1.msra.mxu0 %v669
    %710 = vmatprep.subr.mxu0 0.0
    %711 = vmatpush1.msra.mxu0 %v671
    %712 = vmatprep.subr.mxu0 0.0
    %713 = vmatpush1.msra.mxu0 %v669
    %714 = vmatprep.subr.mxu0 0.0
    %715 = vmatpush1.msra.mxu0 %v671
    %716 = vmatprep.subr.mxu0 0.0
    %717 = vmatpush1.msra.mxu0 0.0
    %718 = vmatprep.subr.mxu0 0.0
    %719 = vmatpush1.msra.mxu0 0.0
    %720 = vmatprep.subr.mxu0 0.0
    %721 = vmatpush1.msra.mxu0 0.0
    %722 = vmatprep.subr.mxu0 0.0
    %723 = vmatpush1.msra.mxu0 0.0
    %724 = vmatprep.subr.mxu0 0.0
    %725 = vmatpush1.msra.mxu0 0.0
    %726 = vmatprep.subr.mxu0 0.0
    %727 = vmatpush1.msra.mxu0 0.0
    %728 = vmatprep.subr.mxu0 0.0
    %729 = vmatpush1.msra.mxu0 0.0
    %730 = vmatprep.subr.mxu0 0.0
    %731 = vmatpush1.msra.mxu0 0.0
    %732 = vmatprep.subr.mxu0 0.0
    %733 = vmatpush1.msra.mxu0 0.0
    %734 = vmatprep.subr.mxu0 0.0
    %735 = vmatpush1.msra.mxu0 0.0
    %736 = vmatprep.subr.mxu0 0.0
    %737 = vmatpush1.msra.mxu0 0.0
    %738 = vmatprep.subr.mxu0 0.0
    %739 = vmatpush1.msra.mxu0 0.0
    %740 = vmatprep.subr.mxu0 0.0
    %741 = vmatpush1.msra.mxu0 0.0
    %742 = vmatprep.subr.mxu0 0.0
    %743 = vmatpush1.msra.mxu0 0.0
    %744 = vmatprep.subr.mxu0 0.0
    %745 = vmatpush1.msra.mxu0 0.0
    %746 = vmatprep.subr.mxu0 0.0
    %747 = vmatpush1.msra.mxu0 0.0
    %748 = vmatprep.subr.mxu0 0.0
    %749 = vmatpush1.msra.mxu0 0.0
    %750 = vmatprep.subr.mxu0 0.0
    %751 = vmatpush1.msra.mxu0 0.0
    %752 = vmatprep.subr.mxu0 0.0
    %753 = vmatpush1.msra.mxu0 0.0
    %754 = vmatprep.subr.mxu0 0.0
    %755 = vmatpush1.msra.mxu0 0.0
    %756 = vmatprep.subr.mxu0 0.0
    %757 = vmatpush1.msra.mxu0 0.0
    %758 = vmatprep.subr.mxu0 0.0
    %759 = vmatpush1.msra.mxu0 0.0
    %760 = vmatprep.subr.mxu0 0.0
    %761 = vmatpush1.msra.mxu0 0.0
    %762 = vmatprep.subr.mxu0 0.0
    %763 = vmatpush1.msra.mxu0 0.0
    %764 = vmatprep.mubr.f32.mxu0 0.0
    %765 = vmatmul.mubr.f32.gmra.mrb[0].mxu0 %v677
    %v766 = vpop.f32.mrb[0].mxu0
    %v767 = vadd.f32 0.0, %v766
    %v768 = vpop.f32.mrb[0].mxu0
    %769 = vmatprep.mubr.f32.mxu0 0.0
    %770 = vmatmul.mubr.f32.gmra.mrb[0].mxu0 %v680
    %v771 = vpop.f32.mrb[0].mxu0
    %v772 = vadd.f32 0.0, %v771
    %v773 = vpop.f32.mrb[0].mxu0
    %774 = vmatprep.mubr.f32.mxu0 0.0
    %775 = vmatmul.mubr.f32.gmra.mrb[0].mxu0 %v683
    %v776 = vpop.f32.mrb[0].mxu0
    %v777 = vadd.f32 0.0, %v776
    %v778 = vpop.f32.mrb[0].mxu0
    %779 = vmatprep.mubr.f32.mxu0 0.0
    %780 = vmatmul.mubr.f32.gmra.mrb[0].mxu0 %v686
    %v781 = vpop.f32.mrb[0].mxu0
    %v782 = vadd.f32 0.0, %v781
    %v783 = vpop.f32.mrb[0].mxu0
    %784 = vmatprep.mubr.f32.mxu0 0.0
    %785 = vmatmul.mubr.f32.gmra.mrb[0].mxu0 %v689
    %v786 = vpop.f32.mrb[0].mxu0
    %v787 = vadd.f32 0.0, %v786
    %v788 = vpop.f32.mrb[0].mxu0
    %789 = vmatprep.mubr.f32.mxu0 0.0
    %790 = vmatmul.mubr.f32.gmra.mrb[0].mxu0 %v692
    %v791 = vpop.f32.mrb[0].mxu0
    %v792 = vadd.f32 0.0, %v791
    %v793 = vpop.f32.mrb[0].mxu0
    %794 = vmatprep.mubr.f32.mxu0 0.0
    %795 = vmatmul.mubr.f32.gmra.mrb[0].mxu0 %v695
    %v796 = vpop.f32.mrb[0].mxu0
    %v797 = vadd.f32 0.0, %v796
    %v798 = vpop.f32.mrb[0].mxu0
    %799 = vmatprep.mubr.f32.mxu0 0.0
    %800 = vmatmul.mubr.f32.gmra.mrb[0].mxu0 %v698
    %v801 = vpop.f32.mrb[0].mxu0
    %v802 = vadd.f32 0.0, %v801
    %v803 = vpop.f32.mrb[0].mxu0
    %804 = vdwg.mxu0
    %v805 = vld [vmem:[#allocation7] sm:$0xff]
    %v806 = vld [vmem:[#allocation7 + $0x8] sm:$0xff]
    %v807 = vld [vmem:[#allocation7 + $0x10] sm:$0xff]
    %v808 = vld [vmem:[#allocation7 + $0x18] sm:$0xff]
    %vm809 = vcmask 130048
    %v811 = vsel %vm809, %v777, 0
    %v814 = vsel %vm809, %v782, 0
    %816 = vmatprep.subr.mxu0 0.0
    %817 = vmatpush1.msra.mxu0 %v807
    %818 = vmatprep.subr.mxu0 0.0
    %819 = vmatpush1.msra.mxu0 %v808
    %820 = vmatprep.subr.mxu0 0.0
    %821 = vmatpush1.msra.mxu0 0.0
    %822 = vmatprep.subr.mxu0 0.0
    %823 = vmatpush1.msra.mxu0 0.0
    %824 = vmatprep.subr.mxu0 0.0
    %825 = vmatpush1.msra.mxu0 0.0
    %826 = vmatprep.subr.mxu0 0.0
    %827 = vmatpush1.msra.mxu0 0.0
    %828 = vmatprep.subr.mxu0 0.0
    %829 = vmatpush1.msra.mxu0 0.0
    %830 = vmatprep.subr.mxu0 0.0
    %831 = vmatpush1.msra.mxu0 0.0
    %832 = vmatprep.subr.mxu0 0.0
    %833 = vmatpush1.msra.mxu0 0.0
    %834 = vmatprep.subr.mxu0 0.0
    %835 = vmatpush1.msra.mxu0 0.0
    %836 = vmatprep.subr.mxu0 0.0
    %837 = vmatpush1.msra.mxu0 0.0
    %838 = vmatprep.subr.mxu0 0.0
    %839 = vmatpush1.msra.mxu0 0.0
    %840 = vmatprep.subr.mxu0 0.0
    %841 = vmatpush1.msra.mxu0 0.0
    %842 = vmatprep.subr.mxu0 0.0
    %843 = vmatpush1.msra.mxu0 0.0
    %844 = vmatprep.subr.mxu0 0.0
    %845 = vmatpush1.msra.mxu0 0.0
    %846 = vmatprep.subr.mxu0 0.0
    %847 = vmatpush1.msra.mxu0 0.0
    %848 = vmatprep.subr.mxu0 0.0
    %849 = vmatpush1.msra.mxu0 0.0
    %850 = vmatprep.subr.mxu0 0.0
    %851 = vmatpush1.msra.mxu0 0.0
    %852 = vmatprep.subr.mxu0 0.0
    %853 = vmatpush1.msra.mxu0 0.0
    %854 = vmatprep.subr.mxu0 0.0
    %855 = vmatpush1.msra.mxu0 0.0
    %856 = vmatprep.subr.mxu0 0.0
    %857 = vmatpush1.msra.mxu0 0.0
    %858 = vmatprep.subr.mxu0 0.0
    %859 = vmatpush1.msra.mxu0 0.0
    %860 = vmatprep.subr.mxu0 0.0
    %861 = vmatpush1.msra.mxu0 0.0
    %862 = vmatprep.subr.mxu0 0.0
    %863 = vmatpush1.msra.mxu0 0.0
    %864 = vmatprep.subr.mxu0 0.0
    %865 = vmatpush1.msra.mxu0 0.0
    %866 = vmatprep.subr.mxu0 0.0
    %867 = vmatpush1.msra.mxu0 0.0
    %868 = vmatprep.subr.mxu0 0.0
    %869 = vmatpush1.msra.mxu0 0.0
    %870 = vmatprep.subr.mxu0 0.0
    %871 = vmatpush1.msra.mxu0 0.0
    %872 = vmatprep.subr.mxu0 0.0
    %873 = vmatpush1.msra.mxu0 0.0
    %874 = vmatprep.subr.mxu0 0.0
    %875 = vmatpush1.msra.mxu0 0.0
    %876 = vmatprep.subr.mxu0 0.0
    %877 = vmatpush1.msra.mxu0 0.0
    %878 = vmatprep.subr.mxu0 0.0
    %879 = vmatpush1.msra.mxu0 0.0
    %880 = vmatprep.mubr.f32.mxu0 0.0
    %881 = vmatmul.mubr.f32.gmra.mrb[0].mxu0 %v811
    %v882 = vpop.f32.mrb[0].mxu0
    %v883 = vadd.f32 0.0, %v882
    %v884 = vpop.f32.mrb[0].mxu0
    %885 = vmatprep.mubr.f32.mxu0 0.0
    %886 = vmatmul.mubr.f32.gmra.mrb[0].mxu0 %v814
    %v887 = vpop.f32.mrb[0].mxu0
    %v888 = vadd.f32 0.0, %v887
    %v889 = vpop.f32.mrb[0].mxu0
    %890 = vdwg.mxu0
    %v891 = vld [vmem:[#allocation7 + $0x20] sm:$0xff]
    %v892 = vld [vmem:[#allocation7 + $0x28] sm:$0xff]
    %v893 = vld [vmem:[#allocation7 + $0x30] sm:$0xff]
    %v894 = vld [vmem:[#allocation7 + $0x38] sm:$0xff]
    %v896 = vsel %vm809, %v797, 0
    %v899 = vsel %vm809, %v802, 0
    %901 = vmatprep.subr.mxu0 0.0
    %902 = vmatpush1.msra.mxu0 %v893
    %903 = vmatprep.subr.mxu0 0.0
    %904 = vmatpush1.msra.mxu0 %v894
    %905 = vmatprep.subr.mxu0 0.0
    %906 = vmatpush1.msra.mxu0 0.0
    %907 = vmatprep.subr.mxu0 0.0
    %908 = vmatpush1.msra.mxu0 0.0
    %909 = vmatprep.subr.mxu0 0.0
    %910 = vmatpush1.msra.mxu0 0.0
    %911 = vmatprep.subr.mxu0 0.0
    %912 = vmatpush1.msra.mxu0 0.0
    %913 = vmatprep.subr.mxu0 0.0
    %914 = vmatpush1.msra.mxu0 0.0
    %915 = vmatprep.subr.mxu0 0.0
    %916 = vmatpush1.msra.mxu0 0.0
    %917 = vmatprep.subr.mxu0 0.0
    %918 = vmatpush1.msra.mxu0 0.0
    %919 = vmatprep.subr.mxu0 0.0
    %920 = vmatpush1.msra.mxu0 0.0
    %921 = vmatprep.subr.mxu0 0.0
    %922 = vmatpush1.msra.mxu0 0.0
    %923 = vmatprep.subr.mxu0 0.0
    %924 = vmatpush1.msra.mxu0 0.0
    %925 = vmatprep.subr.mxu0 0.0
    %926 = vmatpush1.msra.mxu0 0.0
    %927 = vmatprep.subr.mxu0 0.0
    %928 = vmatpush1.msra.mxu0 0.0
    %929 = vmatprep.subr.mxu0 0.0
    %930 = vmatpush1.msra.mxu0 0.0
    %931 = vmatprep.subr.mxu0 0.0
    %932 = vmatpush1.msra.mxu0 0.0
    %933 = vmatprep.subr.mxu0 0.0
    %934 = vmatpush1.msra.mxu0 0.0
    %935 = vmatprep.subr.mxu0 0.0
    %936 = vmatpush1.msra.mxu0 0.0
    %937 = vmatprep.subr.mxu0 0.0
    %938 = vmatpush1.msra.mxu0 0.0
    %939 = vmatprep.subr.mxu0 0.0
    %940 = vmatpush1.msra.mxu0 0.0
    %941 = vmatprep.subr.mxu0 0.0
    %942 = vmatpush1.msra.mxu0 0.0
    %943 = vmatprep.subr.mxu0 0.0
    %944 = vmatpush1.msra.mxu0 0.0
    %945 = vmatprep.subr.mxu0 0.0
    %946 = vmatpush1.msra.mxu0 0.0
    %947 = vmatprep.subr.mxu0 0.0
    %948 = vmatpush1.msra.mxu0 0.0
    %949 = vmatprep.subr.mxu0 0.0
    %950 = vmatpush1.msra.mxu0 0.0
    %951 = vmatprep.subr.mxu0 0.0
    %952 = vmatpush1.msra.mxu0 0.0
    %953 = vmatprep.subr.mxu0 0.0
    %954 = vmatpush1.msra.mxu0 0.0
    %955 = vmatprep.subr.mxu0 0.0
    %956 = vmatpush1.msra.mxu0 0.0
    %957 = vmatprep.subr.mxu0 0.0
    %958 = vmatpush1.msra.mxu0 0.0
    %959 = vmatprep.subr.mxu0 0.0
    %960 = vmatpush1.msra.mxu0 0.0
    %961 = vmatprep.subr.mxu0 0.0
    %962 = vmatpush1.msra.mxu0 0.0
    %963 = vmatprep.subr.mxu0 0.0
    %964 = vmatpush1.msra.mxu0 0.0
    %965 = vmatprep.mubr.f32.mxu0 0.0
    %966 = vmatmul.mubr.f32.gmra.mrb[0].mxu0 %v896
    %v967 = vpop.f32.mrb[0].mxu0
    %v968 = vadd.f32 0.0, %v967
    %v969 = vpop.f32.mrb[0].mxu0
    %970 = vmatprep.mubr.f32.mxu0 0.0
    %971 = vmatmul.mubr.f32.gmra.mrb[0].mxu0 %v899
    %v972 = vpop.f32.mrb[0].mxu0
    %v973 = vadd.f32 0.0, %v972
    %v974 = vpop.f32.mrb[0].mxu0
    %975 = vdwg.mxu0
    %v977 = vsel %vm809, %v767, 0
    %v980 = vsel %vm809, %v772, 0
    %982 = vmatprep.subr.mxu0 0.0
    %983 = vmatpush1.msra.mxu0 %v805
    %984 = vmatprep.subr.mxu0 0.0
    %985 = vmatpush1.msra.mxu0 %v806
    %986 = vmatprep.subr.mxu0 0.0
    %987 = vmatpush1.msra.mxu0 0.0
    %988 = vmatprep.subr.mxu0 0.0
    %989 = vmatpush1.msra.mxu0 0.0
    %990 = vmatprep.subr.mxu0 0.0
    %991 = vmatpush1.msra.mxu0 0.0
    %992 = vmatprep.subr.mxu0 0.0
    %993 = vmatpush1.msra.mxu0 0.0
    %994 = vmatprep.subr.mxu0 0.0
    %995 = vmatpush1.msra.mxu0 0.0
    %996 = vmatprep.subr.mxu0 0.0
    %997 = vmatpush1.msra.mxu0 0.0
    %998 = vmatprep.subr.mxu0 0.0
    %999 = vmatpush1.msra.mxu0 0.0
    %1000 = vmatprep.subr.mxu0 0.0
    %1001 = vmatpush1.msra.mxu0 0.0
    %1002 = vmatprep.subr.mxu0 0.0
    %1003 = vmatpush1.msra.mxu0 0.0
    %1004 = vmatprep.subr.mxu0 0.0
    %1005 = vmatpush1.msra.mxu0 0.0
    %1006 = vmatprep.subr.mxu0 0.0
    %1007 = vmatpush1.msra.mxu0 0.0
    %1008 = vmatprep.subr.mxu0 0.0
    %1009 = vmatpush1.msra.mxu0 0.0
    %1010 = vmatprep.subr.mxu0 0.0
    %1011 = vmatpush1.msra.mxu0 0.0
    %1012 = vmatprep.subr.mxu0 0.0
    %1013 = vmatpush1.msra.mxu0 0.0
    %1014 = vmatprep.subr.mxu0 0.0
    %1015 = vmatpush1.msra.mxu0 0.0
    %1016 = vmatprep.subr.mxu0 0.0
    %1017 = vmatpush1.msra.mxu0 0.0
    %1018 = vmatprep.subr.mxu0 0.0
    %1019 = vmatpush1.msra.mxu0 0.0
    %1020 = vmatprep.subr.mxu0 0.0
    %1021 = vmatpush1.msra.mxu0 0.0
    %1022 = vmatprep.subr.mxu0 0.0
    %1023 = vmatpush1.msra.mxu0 0.0
    %1024 = vmatprep.subr.mxu0 0.0
    %1025 = vmatpush1.msra.mxu0 0.0
    %1026 = vmatprep.subr.mxu0 0.0
    %1027 = vmatpush1.msra.mxu0 0.0
    %1028 = vmatprep.subr.mxu0 0.0
    %1029 = vmatpush1.msra.mxu0 0.0
    %1030 = vmatprep.subr.mxu0 0.0
    %1031 = vmatpush1.msra.mxu0 0.0
    %1032 = vmatprep.subr.mxu0 0.0
    %1033 = vmatpush1.msra.mxu0 0.0
    %1034 = vmatprep.subr.mxu0 0.0
    %1035 = vmatpush1.msra.mxu0 0.0
    %1036 = vmatprep.subr.mxu0 0.0
    %1037 = vmatpush1.msra.mxu0 0.0
    %1038 = vmatprep.subr.mxu0 0.0
    %1039 = vmatpush1.msra.mxu0 0.0
    %1040 = vmatprep.subr.mxu0 0.0
    %1041 = vmatpush1.msra.mxu0 0.0
    %1042 = vmatprep.subr.mxu0 0.0
    %1043 = vmatpush1.msra.mxu0 0.0
    %1044 = vmatprep.subr.mxu0 0.0
    %1045 = vmatpush1.msra.mxu0 0.0
    %1046 = vmatprep.mubr.f32.mxu0 0.0
    %1047 = vmatmul.mubr.f32.gmra.mrb[0].mxu0 %v977
    %v1048 = vpop.f32.mrb[0].mxu0
    %v1049 = vadd.f32 %v883, %v1048
    %v1050 = vpop.f32.mrb[0].mxu0
    %1051 = vmatprep.mubr.f32.mxu0 0.0
    %1052 = vmatmul.mubr.f32.gmra.mrb[0].mxu0 %v980
    %v1053 = vpop.f32.mrb[0].mxu0
    %v1054 = vadd.f32 %v888, %v1053
    %v1055 = vpop.f32.mrb[0].mxu0
    %1056 = vdwg.mxu0
    %v1058 = vsel %vm809, %v787, 0
    %v1061 = vsel %vm809, %v792, 0
    %1063 = vmatprep.subr.mxu0 0.0
    %1064 = vmatpush1.msra.mxu0 %v891
    %1065 = vmatprep.subr.mxu0 0.0
    %1066 = vmatpush1.msra.mxu0 %v892
    %1067 = vmatprep.subr.mxu0 0.0
    %1068 = vmatpush1.msra.mxu0 0.0
    %1069 = vmatprep.subr.mxu0 0.0
    %1070 = vmatpush1.msra.mxu0 0.0
    %1071 = vmatprep.subr.mxu0 0.0
    %1072 = vmatpush1.msra.mxu0 0.0
    %1073 = vmatprep.subr.mxu0 0.0
    %1074 = vmatpush1.msra.mxu0 0.0
    %1075 = vmatprep.subr.mxu0 0.0
    %1076 = vmatpush1.msra.mxu0 0.0
    %1077 = vmatprep.subr.mxu0 0.0
    %1078 = vmatpush1.msra.mxu0 0.0
    %1079 = vmatprep.subr.mxu0 0.0
    %1080 = vmatpush1.msra.mxu0 0.0
    %1081 = vmatprep.subr.mxu0 0.0
    %1082 = vmatpush1.msra.mxu0 0.0
    %1083 = vmatprep.subr.mxu0 0.0
    %1084 = vmatpush1.msra.mxu0 0.0
    %1085 = vmatprep.subr.mxu0 0.0
    %1086 = vmatpush1.msra.mxu0 0.0
    %1087 = vmatprep.subr.mxu0 0.0
    %1088 = vmatpush1.msra.mxu0 0.0
    %1089 = vmatprep.subr.mxu0 0.0
    %1090 = vmatpush1.msra.mxu0 0.0
    %1091 = vmatprep.subr.mxu0 0.0
    %1092 = vmatpush1.msra.mxu0 0.0
    %1093 = vmatprep.subr.mxu0 0.0
    %1094 = vmatpush1.msra.mxu0 0.0
    %1095 = vmatprep.subr.mxu0 0.0
    %1096 = vmatpush1.msra.mxu0 0.0
    %1097 = vmatprep.subr.mxu0 0.0
    %1098 = vmatpush1.msra.mxu0 0.0
    %1099 = vmatprep.subr.mxu0 0.0
    %1100 = vmatpush1.msra.mxu0 0.0
    %1101 = vmatprep.subr.mxu0 0.0
    %1102 = vmatpush1.msra.mxu0 0.0
    %1103 = vmatprep.subr.mxu0 0.0
    %1104 = vmatpush1.msra.mxu0 0.0
    %1105 = vmatprep.subr.mxu0 0.0
    %1106 = vmatpush1.msra.mxu0 0.0
    %1107 = vmatprep.subr.mxu0 0.0
    %1108 = vmatpush1.msra.mxu0 0.0
    %1109 = vmatprep.subr.mxu0 0.0
    %1110 = vmatpush1.msra.mxu0 0.0
    %1111 = vmatprep.subr.mxu0 0.0
    %1112 = vmatpush1.msra.mxu0 0.0
    %1113 = vmatprep.subr.mxu0 0.0
    %1114 = vmatpush1.msra.mxu0 0.0
    %1115 = vmatprep.subr.mxu0 0.0
    %1116 = vmatpush1.msra.mxu0 0.0
    %1117 = vmatprep.subr.mxu0 0.0
    %1118 = vmatpush1.msra.mxu0 0.0
    %1119 = vmatprep.subr.mxu0 0.0
    %1120 = vmatpush1.msra.mxu0 0.0
    %1121 = vmatprep.subr.mxu0 0.0
    %1122 = vmatpush1.msra.mxu0 0.0
    %1123 = vmatprep.subr.mxu0 0.0
    %1124 = vmatpush1.msra.mxu0 0.0
    %1125 = vmatprep.subr.mxu0 0.0
    %1126 = vmatpush1.msra.mxu0 0.0
    %1127 = vmatprep.mubr.f32.mxu0 0.0
    %1128 = vmatmul.mubr.f32.gmra.mrb[0].mxu0 %v1058
    %v1129 = vpop.f32.mrb[0].mxu0
    %v1130 = vadd.f32 %v968, %v1129
    %v1131 = vpop.f32.mrb[0].mxu0
    %1132 = vmatprep.mubr.f32.mxu0 0.0
    %1133 = vmatmul.mubr.f32.gmra.mrb[0].mxu0 %v1061
    %v1134 = vpop.f32.mrb[0].mxu0
    %v1135 = vadd.f32 %v973, %v1134
    %v1136 = vpop.f32.mrb[0].mxu0
    %1137 = vdwg.mxu0
    %v1138 = vadd.f32 %v1049, %v1130
    %v1139 = vadd.f32 %v1054, %v1135
    %v1140 = vadd.f32 %v77, %v1138
    %v1141 = vadd.f32 %v78, %v1139
    %v1142 = vld [vmem:[%s9] sm:$0x1]
    %v1143 = vmul.f32 %v1140, %v1140
    %v1144 = vmul.f32 %v1141, %v1141
    %v1145 = vsel %vm82, %v1143, 0.0
    %1146 = vadd.xlane.f32.xlu0 %v1145
    %v1147 = vpop.xlane.xlu0 %1146
    %v1148 = vsel %vm82, %v1144, 0.0
    %1149 = vadd.xlane.f32.xlu0 %v1148
    %v1150 = vpop.xlane.xlu0 %1149
    %v1151 = vmul.f32 %v1147, %v89
    %v1152 = vmul.f32 %v1150, %v89
    %v1153 = vadd.f32 %v1151, 1e-05
    %v1154 = vadd.f32 %v1152, 1e-05
    %v1155 = vrsqrt.pop %v1153
    %v1156 = vrsqrt.pop %v1154
    %v1157 = vmul.f32 %v1140, %v1155
    %v1158 = vmul.f32 %v1141, %v1156
    %v1160 = vlaneseq
    %v1161 = vshrl.u32 %v1160, 7
    %v1162 = vsub.s32 0, %v1161
    %v1163 = vrot.slane %v1142, %v1162
    %v1165 = vmul.f32 %v1157, %v1163
    %v1166 = vmul.f32 %v1158, %v1163
    %v1167 = vld [vmem:[%s6] sm:$0xff]
    %v1168 = vld [vmem:[%s6 + $0x8] sm:$0xff]
    %v1169 = vld [vmem:[%s6 + $0x10] sm:$0xff]
    %v1170 = vld [vmem:[%s6 + $0x18] sm:$0xff]
    %v1171 = vld [vmem:[%s6 + $0x20] sm:$0xff]
    %v1172 = vld [vmem:[%s6 + $0x28] sm:$0xff]
    %v1173 = vld [vmem:[%s6 + $0x30] sm:$0xff]
    %v1174 = vld [vmem:[%s6 + $0x38] sm:$0xff]
    %v1175 = vld [vmem:[%s6 + $0x40] sm:$0xff]
    %v1176 = vld [vmem:[%s6 + $0x48] sm:$0xff]
    %v1177 = vld [vmem:[%s6 + $0x50] sm:$0xff]
    %v1178 = vld [vmem:[%s6 + $0x58] sm:$0xff]
    %v1179 = vld [vmem:[%s6 + $0x60] sm:$0xff]
    %v1180 = vld [vmem:[%s6 + $0x68] sm:$0xff]
    %v1181 = vld [vmem:[%s6 + $0x70] sm:$0xff]
    %v1182 = vld [vmem:[%s6 + $0x78] sm:$0xff]
    %v1183 = vld [vmem:[%s6 + $0x80] sm:$0xff]
    %v1184 = vld [vmem:[%s6 + $0x88] sm:$0xff]
    %v1185 = vld [vmem:[%s6 + $0x90] sm:$0xff]
    %v1186 = vld [vmem:[%s6 + $0x98] sm:$0xff]
    %v1187 = vld [vmem:[%s6 + $0xa0] sm:$0xff]
    %v1188 = vld [vmem:[%s6 + $0xa8] sm:$0xff]
    %v1189 = vld [vmem:[%s6 + $0xb0] sm:$0xff]
    %v1190 = vld [vmem:[%s6 + $0xb8] sm:$0xff]
    %v1192 = vsel %vm82, %v1165, 0
    %v1195 = vsel %vm82, %v1166, 0
    %1197 = vmatprep.subr.mxu0 %v1168
    %1198 = vmatpush1.msra.mxu0 %v1167
    %1199 = vmatprep.subr.mxu0 %v1171
    %1200 = vmatpush1.msra.mxu0 %v1170
    %1201 = vmatprep.subr.mxu0 %v1174
    %1202 = vmatpush1.msra.mxu0 %v1173
    %1203 = vmatprep.subr.mxu0 %v1177
    %1204 = vmatpush1.msra.mxu0 %v1176
    %1205 = vmatprep.subr.mxu0 %v1180
    %1206 = vmatpush1.msra.mxu0 %v1179
    %1207 = vmatprep.subr.mxu0 %v1183
    %1208 = vmatpush1.msra.mxu0 %v1182
    %1209 = vmatprep.subr.mxu0 %v1186
    %1210 = vmatpush1.msra.mxu0 %v1185
    %1211 = vmatprep.subr.mxu0 %v1189
    %1212 = vmatpush1.msra.mxu0 %v1188
    %1213 = vmatprep.subr.mxu0 0.0
    %1214 = vmatpush1.msra.mxu0 0.0
    %1215 = vmatprep.subr.mxu0 0.0
    %1216 = vmatpush1.msra.mxu0 0.0
    %1217 = vmatprep.subr.mxu0 0.0
    %1218 = vmatpush1.msra.mxu0 0.0
    %1219 = vmatprep.subr.mxu0 0.0
    %1220 = vmatpush1.msra.mxu0 0.0
    %1221 = vmatprep.subr.mxu0 0.0
    %1222 = vmatpush1.msra.mxu0 0.0
    %1223 = vmatprep.subr.mxu0 0.0
    %1224 = vmatpush1.msra.mxu0 0.0
    %1225 = vmatprep.subr.mxu0 0.0
    %1226 = vmatpush1.msra.mxu0 0.0
    %1227 = vmatprep.subr.mxu0 0.0
    %1228 = vmatpush1.msra.mxu0 0.0
    %1229 = vmatprep.subr.mxu0 0.0
    %1230 = vmatpush1.msra.mxu0 0.0
    %1231 = vmatprep.subr.mxu0 0.0
    %1232 = vmatpush1.msra.mxu0 0.0
    %1233 = vmatprep.subr.mxu0 0.0
    %1234 = vmatpush1.msra.mxu0 0.0
    %1235 = vmatprep.subr.mxu0 0.0
    %1236 = vmatpush1.msra.mxu0 0.0
    %1237 = vmatprep.subr.mxu0 0.0
    %1238 = vmatpush1.msra.mxu0 0.0
    %1239 = vmatprep.subr.mxu0 0.0
    %1240 = vmatpush1.msra.mxu0 0.0
    %1241 = vmatprep.subr.mxu0 0.0
    %1242 = vmatpush1.msra.mxu0 0.0
    %1243 = vmatprep.subr.mxu0 0.0
    %1244 = vmatpush1.msra.mxu0 0.0
    %1245 = vmatprep.subr.mxu0 0.0
    %1246 = vmatpush1.msra.mxu0 0.0
    %1247 = vmatprep.subr.mxu0 0.0
    %1248 = vmatpush1.msra.mxu0 0.0
    %1249 = vmatprep.subr.mxu0 0.0
    %1250 = vmatpush1.msra.mxu0 0.0
    %1251 = vmatprep.subr.mxu0 0.0
    %1252 = vmatpush1.msra.mxu0 0.0
    %1253 = vmatprep.subr.mxu0 0.0
    %1254 = vmatpush1.msra.mxu0 0.0
    %1255 = vmatprep.subr.mxu0 0.0
    %1256 = vmatpush1.msra.mxu0 0.0
    %1257 = vmatprep.subr.mxu0 0.0
    %1258 = vmatpush1.msra.mxu0 0.0
    %1259 = vmatprep.subr.mxu0 0.0
    %1260 = vmatpush1.msra.mxu0 0.0
    %1261 = vmatprep.mubr.f32.mxu0 0.0
    %1262 = vmatmul.mubr.f32.gmra.mrb[0].mxu0 %v1192
    %v1263 = vpop.f32.mrb[0].mxu0
    %v1264 = vadd.f32 0.0, %v1263
    %v1265 = vpop.f32.mrb[0].mxu0
    %v1266 = vadd.f32 0.0, %v1265
    %1267 = vmatprep.mubr.f32.mxu0 0.0
    %1268 = vmatmul.mubr.f32.gmra.mrb[0].mxu0 %v1195
    %v1269 = vpop.f32.mrb[0].mxu0
    %v1270 = vadd.f32 0.0, %v1269
    %v1271 = vpop.f32.mrb[0].mxu0
    %v1272 = vadd.f32 0.0, %v1271
    %1273 = vdwg.mxu0
    %1274 = vmatprep.subr.mxu0 0.0
    %1275 = vmatpush1.msra.mxu0 %v1169
    %1276 = vmatprep.subr.mxu0 0.0
    %1277 = vmatpush1.msra.mxu0 %v1172
    %1278 = vmatprep.subr.mxu0 0.0
    %1279 = vmatpush1.msra.mxu0 %v1175
    %1280 = vmatprep.subr.mxu0 0.0
    %1281 = vmatpush1.msra.mxu0 %v1178
    %1282 = vmatprep.subr.mxu0 0.0
    %1283 = vmatpush1.msra.mxu0 %v1181
    %1284 = vmatprep.subr.mxu0 0.0
    %1285 = vmatpush1.msra.mxu0 %v1184
    %1286 = vmatprep.subr.mxu0 0.0
    %1287 = vmatpush1.msra.mxu0 %v1187
    %1288 = vmatprep.subr.mxu0 0.0
    %1289 = vmatpush1.msra.mxu0 %v1190
    %1290 = vmatprep.subr.mxu0 0.0
    %1291 = vmatpush1.msra.mxu0 0.0
    %1292 = vmatprep.subr.mxu0 0.0
    %1293 = vmatpush1.msra.mxu0 0.0
    %1294 = vmatprep.subr.mxu0 0.0
    %1295 = vmatpush1.msra.mxu0 0.0
    %1296 = vmatprep.subr.mxu0 0.0
    %1297 = vmatpush1.msra.mxu0 0.0
    %1298 = vmatprep.subr.mxu0 0.0
    %1299 = vmatpush1.msra.mxu0 0.0
    %1300 = vmatprep.subr.mxu0 0.0
    %1301 = vmatpush1.msra.mxu0 0.0
    %1302 = vmatprep.subr.mxu0 0.0
    %1303 = vmatpush1.msra.mxu0 0.0
    %1304 = vmatprep.subr.mxu0 0.0
    %1305 = vmatpush1.msra.mxu0 0.0
    %1306 = vmatprep.subr.mxu0 0.0
    %1307 = vmatpush1.msra.mxu0 0.0
    %1308 = vmatprep.subr.mxu0 0.0
    %1309 = vmatpush1.msra.mxu0 0.0
    %1310 = vmatprep.subr.mxu0 0.0
    %1311 = vmatpush1.msra.mxu0 0.0
    %1312 = vmatprep.subr.mxu0 0.0
    %1313 = vmatpush1.msra.mxu0 0.0
    %1314 = vmatprep.subr.mxu0 0.0
    %1315 = vmatpush1.msra.mxu0 0.0
    %1316 = vmatprep.subr.mxu0 0.0
    %1317 = vmatpush1.msra.mxu0 0.0
    %1318 = vmatprep.subr.mxu0 0.0
    %1319 = vmatpush1.msra.mxu0 0.0
    %1320 = vmatprep.subr.mxu0 0.0
    %1321 = vmatpush1.msra.mxu0 0.0
    %1322 = vmatprep.subr.mxu0 0.0
    %1323 = vmatpush1.msra.mxu0 0.0
    %1324 = vmatprep.subr.mxu0 0.0
    %1325 = vmatpush1.msra.mxu0 0.0
    %1326 = vmatprep.subr.mxu0 0.0
    %1327 = vmatpush1.msra.mxu0 0.0
    %1328 = vmatprep.subr.mxu0 0.0
    %1329 = vmatpush1.msra.mxu0 0.0
    %1330 = vmatprep.subr.mxu0 0.0
    %1331 = vmatpush1.msra.mxu0 0.0
    %1332 = vmatprep.subr.mxu0 0.0
    %1333 = vmatpush1.msra.mxu0 0.0
    %1334 = vmatprep.subr.mxu0 0.0
    %1335 = vmatpush1.msra.mxu0 0.0
    %1336 = vmatprep.subr.mxu0 0.0
    %1337 = vmatpush1.msra.mxu0 0.0
    %1338 = vmatprep.mubr.f32.mxu0 0.0
    %1339 = vmatmul.mubr.f32.gmra.mrb[0].mxu0 %v1192
    %v1340 = vpop.f32.mrb[0].mxu0
    %v1341 = vadd.f32 0.0, %v1340
    %v1342 = vpop.f32.mrb[0].mxu0
    %1343 = vmatprep.mubr.f32.mxu0 0.0
    %1344 = vmatmul.mubr.f32.gmra.mrb[0].mxu0 %v1195
    %v1345 = vpop.f32.mrb[0].mxu0
    %v1346 = vadd.f32 0.0, %v1345
    %v1347 = vpop.f32.mrb[0].mxu0
    %1348 = vdwg.mxu0
    %v1349 = vxor.u32 %v1264, 2147483648
    %v1350 = vxor.u32 %v1266, 2147483648
    %v1351 = vxor.u32 %v1270, 2147483648
    %v1352 = vxor.u32 %v1272, 2147483648
    %v1353 = vmul.f32 %v1349, 1.442695
    %v1354 = vpow.pop %v1353
    %v1355 = vmul.f32 %v1350, 1.442695
    %v1356 = vpow.pop %v1355
    %v1357 = vmul.f32 %v1351, 1.442695
    %v1358 = vpow.pop %v1357
    %v1359 = vmul.f32 %v1352, 1.442695
    %v1360 = vpow.pop %v1359
    %v1361 = vadd.f32 %v1354, 1.0
    %v1362 = vadd.f32 %v1356, 1.0
    %v1363 = vadd.f32 %v1358, 1.0
    %v1364 = vadd.f32 %v1360, 1.0
    %v1365 = vrcp.pop %v1361
    %v1366 = vmul.f32 1.0, %v1365
    %v1367 = vrcp.pop %v1362
    %v1368 = vmul.f32 1.0, %v1367
    %v1369 = vrcp.pop %v1363
    %v1370 = vmul.f32 1.0, %v1369
    %v1371 = vrcp.pop %v1364
    %v1372 = vmul.f32 1.0, %v1371
    %v1373 = vmul.f32 %v1366, %v1264
    %v1374 = vmul.f32 %v1368, %v1266
    %v1375 = vmul.f32 %v1370, %v1270
    %v1376 = vmul.f32 %v1372, %v1272
    %1381 = vrot.lane.b32.xlu0 %v1266, 64
    %v1382 = vpop.permute.xlu0 %1381
    %1383 = vrot.lane.b32.xlu0 %v1341, 64
    %v1384 = vpop.permute.xlu0 %1383
    %1385 = vrot.lane.b32.xlu0 %v1272, 64
    %v1386 = vpop.permute.xlu0 %1385
    %1387 = vrot.lane.b32.xlu0 %v1346, 64
    %v1388 = vpop.permute.xlu0 %1387
    %v1389 = vsel %vm82, %v1382, %v1384
    %v1390 = vsel %vm82, %v1386, %v1388
    %v1395 = vmul.f32 %v1373, %v1389
    %v1396 = vmul.f32 %v1374, %v1384
    %v1397 = vmul.f32 %v1375, %v1390
    %v1398 = vmul.f32 %v1376, %v1388
    %v1399 = vld [vmem:[%s7] sm:$0xff]
    %v1400 = vld [vmem:[%s7 + $0x8] sm:$0xff]
    %v1401 = vld [vmem:[%s7 + $0x10] sm:$0xff]
    %v1402 = vld [vmem:[%s7 + $0x18] sm:$0xff]
    %v1403 = vld [vmem:[%s7 + $0x20] sm:$0xff]
    %v1404 = vld [vmem:[%s7 + $0x28] sm:$0xff]
    %v1405 = vld [vmem:[%s7 + $0x30] sm:$0xff]
    %v1406 = vld [vmem:[%s7 + $0x38] sm:$0xff]
    %v1407 = vld [vmem:[%s7 + $0x40] sm:$0xff]
    %v1408 = vld [vmem:[%s7 + $0x48] sm:$0xff]
    %v1409 = vld [vmem:[%s7 + $0x50] sm:$0xff]
    %v1410 = vld [vmem:[%s7 + $0x58] sm:$0xff]
    %v1411 = vld [vmem:[%s7 + $0x60] sm:$0xff]
    %v1412 = vld [vmem:[%s7 + $0x68] sm:$0xff]
    %v1413 = vld [vmem:[%s7 + $0x70] sm:$0xff]
    %v1414 = vld [vmem:[%s7 + $0x78] sm:$0xff]
    %v1415 = vld [vmem:[%s7 + $0x80] sm:$0xff]
    %v1416 = vld [vmem:[%s7 + $0x88] sm:$0xff]
    %v1417 = vld [vmem:[%s7 + $0x90] sm:$0xff]
    %v1418 = vld [vmem:[%s7 + $0x98] sm:$0xff]
    %v1419 = vld [vmem:[%s7 + $0xa0] sm:$0xff]
    %v1420 = vld [vmem:[%s7 + $0xa8] sm:$0xff]
    %v1421 = vld [vmem:[%s7 + $0xb0] sm:$0xff]
    %v1422 = vld [vmem:[%s7 + $0xb8] sm:$0xff]
    %v1424 = vsel %vm82, %v1396, 0
    %v1427 = vsel %vm82, %v1398, 0
    %1429 = vmatprep.subr.mxu0 0.0
    %1430 = vmatpush1.msra.mxu0 %v1399
    %1431 = vmatprep.subr.mxu0 0.0
    %1432 = vmatpush1.msra.mxu0 %v1400
    %1433 = vmatprep.subr.mxu0 0.0
    %1434 = vmatpush1.msra.mxu0 %v1401
    %1435 = vmatprep.subr.mxu0 0.0
    %1436 = vmatpush1.msra.mxu0 %v1402
    %1437 = vmatprep.subr.mxu0 0.0
    %1438 = vmatpush1.msra.mxu0 %v1403
    %1439 = vmatprep.subr.mxu0 0.0
    %1440 = vmatpush1.msra.mxu0 %v1404
    %1441 = vmatprep.subr.mxu0 0.0
    %1442 = vmatpush1.msra.mxu0 %v1405
    %1443 = vmatprep.subr.mxu0 0.0
    %1444 = vmatpush1.msra.mxu0 %v1406
    %1445 = vmatprep.subr.mxu0 0.0
    %1446 = vmatpush1.msra.mxu0 %v1407
    %1447 = vmatprep.subr.mxu0 0.0
    %1448 = vmatpush1.msra.mxu0 %v1408
    %1449 = vmatprep.subr.mxu0 0.0
    %1450 = vmatpush1.msra.mxu0 %v1409
    %1451 = vmatprep.subr.mxu0 0.0
    %1452 = vmatpush1.msra.mxu0 %v1410
    %1453 = vmatprep.subr.mxu0 0.0
    %1454 = vmatpush1.msra.mxu0 %v1411
    %1455 = vmatprep.subr.mxu0 0.0
    %1456 = vmatpush1.msra.mxu0 %v1412
    %1457 = vmatprep.subr.mxu0 0.0
    %1458 = vmatpush1.msra.mxu0 %v1413
    %1459 = vmatprep.subr.mxu0 0.0
    %1460 = vmatpush1.msra.mxu0 %v1414
    %1461 = vmatprep.subr.mxu0 0.0
    %1462 = vmatpush1.msra.mxu0 %v1415
    %1463 = vmatprep.subr.mxu0 0.0
    %1464 = vmatpush1.msra.mxu0 %v1416
    %1465 = vmatprep.subr.mxu0 0.0
    %1466 = vmatpush1.msra.mxu0 %v1417
    %1467 = vmatprep.subr.mxu0 0.0
    %1468 = vmatpush1.msra.mxu0 %v1418
    %1469 = vmatprep.subr.mxu0 0.0
    %1470 = vmatpush1.msra.mxu0 %v1419
    %1471 = vmatprep.subr.mxu0 0.0
    %1472 = vmatpush1.msra.mxu0 %v1420
    %1473 = vmatprep.subr.mxu0 0.0
    %1474 = vmatpush1.msra.mxu0 %v1421
    %1475 = vmatprep.subr.mxu0 0.0
    %1476 = vmatpush1.msra.mxu0 %v1422
    %1477 = vmatprep.subr.mxu0 0.0
    %1478 = vmatpush1.msra.mxu0 0.0
    %1479 = vmatprep.subr.mxu0 0.0
    %1480 = vmatpush1.msra.mxu0 0.0
    %1481 = vmatprep.subr.mxu0 0.0
    %1482 = vmatpush1.msra.mxu0 0.0
    %1483 = vmatprep.subr.mxu0 0.0
    %1484 = vmatpush1.msra.mxu0 0.0
    %1485 = vmatprep.subr.mxu0 0.0
    %1486 = vmatpush1.msra.mxu0 0.0
    %1487 = vmatprep.subr.mxu0 0.0
    %1488 = vmatpush1.msra.mxu0 0.0
    %1489 = vmatprep.subr.mxu0 0.0
    %1490 = vmatpush1.msra.mxu0 0.0
    %1491 = vmatprep.subr.mxu0 0.0
    %1492 = vmatpush1.msra.mxu0 0.0
    %1493 = vmatprep.mubr.f32.mxu0 %v1424
    %1494 = vmatmul.mubr.f32.gmra.mrb[0].mxu0 %v1395
    %v1495 = vpop.f32.mrb[0].mxu0
    %v1496 = vadd.f32 0.0, %v1495
    %v1497 = vpop.f32.mrb[0].mxu0
    %1498 = vmatprep.mubr.f32.mxu0 %v1427
    %1499 = vmatmul.mubr.f32.gmra.mrb[0].mxu0 %v1397
    %v1500 = vpop.f32.mrb[0].mxu0
    %v1501 = vadd.f32 0.0, %v1500
    %v1502 = vpop.f32.mrb[0].mxu0
    %1503 = vdwg.mxu0
    %v1504 = vadd.f32 %v1140, %v1496
    %v1505 = vadd.f32 %v1141, %v1501
    %1506 = vst.msk [vmem:[#allocation8] sm:$0xff] %vm82, %v1504
    %1507 = vst.msk [vmem:[#allocation8 + $0x8] sm:$0xff] %vm82, %v1505
    // Predicated region
    $region54: #{transformer_block.1} parent=1 // pred_check
      _
    $region55: #{transformer_block.1} parent=1 // pred_check_branch
      %1509 = sbr.rel (0) target = $region57
    $region56: #{transformer_block.1} parent=1 // pred_region
      %s1511 = ssub.s32 256, 256
      %1512 = vsyncadd [#allocation4], %s1511
      %s1513 = sshll.u32 [#allocation8], 4
      %s1514 = int_to_ptr.vmem [resolvable:$true] %s1513
      %1519 = dma.vmem_to_hbm [thread:$0]  %s1514, 256, %s10, [#allocation4], 128, 128, 8
    $region57: #{transformer_block.1} parent=1 // pred_fallthru
      _
    // Predicated region
    $region58: #{transformer_block.1} parent=1 // pred_check
      _
    $region59: #{transformer_block.1} parent=1 // pred_check_branch
      %1521 = sbr.rel (0) target = $region61
    $region60: #{transformer_block.1} parent=1 // pred_region
      %1522 = dma.done [#allocation4], 256
    $region61: #{transformer_block.1} parent=1 // pred_fallthru
      _
    %1523 = vsyncpa [#allocation3], 1
    %1524 = vsyncpa [#allocation6], 1
    %1525 = vsyncpa [#allocation4], 1

</llo_original>
